<compile_context>
chip_gen: v6e
topology: v6e:2x2x1
jax: 0.10.0
libtpu: 0.0.40
codegen_flags: <defaults>
</compile_context>

<pallas_src>
import functools

import jax
import jax.numpy as jnp
from jax.experimental import pallas as pl
from jax.experimental.pallas import tpu as pltpu

NHEADS = 8  # static head count (same default as the PyTorch module)


# --------------------------------------------------------------------------
# small helpers (kernel-side unless noted)
# --------------------------------------------------------------------------
def _layer_norm(x, w, b, eps=1e-5):     # shared with the pure-JAX reference
    mu = jnp.mean(x, axis=-1, keepdims=True)
    var = jnp.mean((x - mu) ** 2, axis=-1, keepdims=True)
    return (x - mu) * jax.lax.rsqrt(var + eps) * w + b


def _softmax(s):
    # exp -> row-sum -> multiply by EUP approximate reciprocal (kernel only).
    m = jnp.max(s, axis=-1, keepdims=True)
    e = jnp.exp(s - m)
    return e * pl.reciprocal(jnp.sum(e, axis=-1, keepdims=True), approx=True)


def _proj(xb, w_ref, b_ref):
    # full-width (N, Din) x (Din, Dout) bf16 matmul, f32 accumulate, f32 bias.
    return jnp.dot(xb, w_ref[...], preferred_element_type=jnp.float32) + b_ref[...]


def _split_heads(t2d, nheads, dh):
    # (N, H*dh) -> (H, N, dh).  Unavoidable O(N*D) relayout; implemented with
    # static lane slices + leading-dim stack (safe Mosaic lowering).
    return jnp.stack([t2d[:, h * dh:(h + 1) * dh] for h in range(nheads)], axis=0)


def _merge_heads(ctx):
    # (H, N, dh) -> (N, H*dh) lane concat; feeds ONE (N, D)x(D, D) out-proj.
    return jnp.concatenate([ctx[h] for h in range(ctx.shape[0])], axis=-1)


def _attention(qh, kh, vh, need_weights):
    """qh (H,Nq,dh) bf16 (already scaled), kh/vh (H,Nk,dh) bf16."""
    s = jnp.einsum("hqe,hke->hqk", qh, kh, preferred_element_type=jnp.float32)
    p = _softmax(s)                                           # f32
    ctx = jnp.einsum("hqk,hke->hqe", p.astype(jnp.bfloat16), vh,
                     preferred_element_type=jnp.float32)
    attn = jnp.mean(p, axis=0) if need_weights else None      # torch: head average
    return ctx, attn


# --------------------------------------------------------------------------
# kernel 1: batch-independent learned-query branch (runs once per forward)
# --------------------------------------------------------------------------
def query_branch_kernel(q_ref, s_wq, s_wk, s_wv, s_bq, s_bk, s_bv, s_wo, s_bo,
                        nq_w, nq_b, c_wq, c_bq, q1p_ref, *, nheads):
    _, D = q_ref.shape
    dh = D // nheads
    scale = 1.0 / float(dh) ** 0.5

    q0 = q_ref[...]                                           # (Q, D) f32
    q0b = q0.astype(jnp.bfloat16)
    qq = _proj(q0b, s_wq, s_bq) * scale
    kq = _proj(q0b, s_wk, s_bk)
    vq = _proj(q0b, s_wv, s_bv)
    ctx, _ = _attention(_split_heads(qq.astype(jnp.bfloat16), nheads, dh),
                        _split_heads(kq.astype(jnp.bfloat16), nheads, dh),
                        _split_heads(vq.astype(jnp.bfloat16), nheads, dh),
                        need_weights=False)
    sa = _proj(_merge_heads(ctx).astype(jnp.bfloat16), s_wo, s_bo)
    q1 = _layer_norm(q0 + sa, nq_w[...], nq_b[...])
    # cross-attention query projection (the 1/sqrt(dh) scale is applied in the
    # main kernel on the projected queries).
    q1p_ref[...] = _proj(q1.astype(jnp.bfloat16), c_wq, c_bq)


# --------------------------------------------------------------------------
# kernel 2: per-sequence encoder layer + cross attention
# --------------------------------------------------------------------------
def boq_main_kernel(x_ref, q1p_ref,
                    e_wq, e_wk, e_wv, e_bq, e_bk, e_bv, e_wo, e_bo,
                    n1_w, n1_b, l1_w, l1_b, l2_w, l2_b, n2_w, n2_b,
                    c_wk, c_wv, c_bk, c_bv, c_wo, c_bo, no_w, no_b,
                    xenc_ref, out_ref, attn_ref, *, nheads):
    S, D = x_ref.shape
    dh = D // nheads
    scale = 1.0 / float(dh) ** 0.5

    x = x_ref[...]                                            # (S, D) f32
    xb = x.astype(jnp.bfloat16)

    # ---- encoder self-attention (post-norm, dropout=0) ----
    qe = _proj(xb, e_wq, e_bq) * scale
    ke = _proj(xb, e_wk, e_bk)
    ve = _proj(xb, e_wv, e_bv)
    ctx, _ = _attention(_split_heads(qe.astype(jnp.bfloat16), nheads, dh),
                        _split_heads(ke.astype(jnp.bfloat16), nheads, dh),
                        _split_heads(ve.astype(jnp.bfloat16), nheads, dh),
                        need_weights=False)
    sa = _proj(_merge_heads(ctx).astype(jnp.bfloat16), e_wo, e_bo)
    x1 = _layer_norm(x + sa, n1_w[...], n1_b[...])

    # ---- feed-forward (ReLU); hidden activation kept bf16 ----
    hid = jax.nn.relu(_proj(x1.astype(jnp.bfloat16), l1_w, l1_b)).astype(jnp.bfloat16)
    ff = _proj(hid, l2_w, l2_b)
    x2 = _layer_norm(x1 + ff, n2_w[...], n2_b[...])
    xenc_ref[...] = x2

    # ---- cross attention: learned queries attend to encoded tokens ----
    x2b = x2.astype(jnp.bfloat16)
    kx = _proj(x2b, c_wk, c_bk)
    vx = _proj(x2b, c_wv, c_bv)
    q1p = q1p_ref[...] * scale                                # (Q, D) precomputed projection
    cctx, attn = _attention(_split_heads(q1p.astype(jnp.bfloat16), nheads, dh),
                            _split_heads(kx.astype(jnp.bfloat16), nheads, dh),
                            _split_heads(vx.astype(jnp.bfloat16), nheads, dh),
                            need_weights=True)
    out = _proj(_merge_heads(cctx).astype(jnp.bfloat16), c_wo, c_bo)
    out_ref[...] = _layer_norm(out, no_w[...], no_b[...])
    attn_ref[...] = attn                                      # (Q, S) head-averaged


# --------------------------------------------------------------------------
# host-side parameter layout plumbing (once, outside the hot path)
# --------------------------------------------------------------------------
def _prep_mha(in_w, in_b, out_w, out_b):
    """torch MultiheadAttention params -> separate pre-transposed bf16 weights."""
    D = out_w.shape[0]

    def row(v):
        return v.reshape(1, D).astype(jnp.float32)

    def wt(w):
        return w.T.astype(jnp.bfloat16)

    return {
        "wq": wt(in_w[:D]), "wk": wt(in_w[D:2 * D]), "wv": wt(in_w[2 * D:]),
        "bq": row(in_b[:D]), "bk": row(in_b[D:2 * D]), "bv": row(in_b[2 * D:]),
        "wo": wt(out_w), "bo": row(out_b),
    }


def _full_spec(shape):
    nd = len(shape)
    return pl.BlockSpec(shape, lambda b, _nd=nd: (0,) * _nd)


# --------------------------------------------------------------------------
# wrapper
# --------------------------------------------------------------------------
def boq_block(x, params, nheads=NHEADS):
    """x: (B, S, D) f32 -> (x_enc (B,S,D), out (B,Q,D), attn (B,Q,S))."""
    B, S, D = x.shape
    Q = params["queries"].shape[1]
    assert D % nheads == 0

    def row(v):
        return v.reshape(1, -1).astype(jnp.float32)

    enc = _prep_mha(params["enc_in_w"], params["enc_in_b"],
                    params["enc_out_w"], params["enc_out_b"])
    sa = _prep_mha(params["sa_in_w"], params["sa_in_b"],
                   params["sa_out_w"], params["sa_out_b"])
    ca = _prep_mha(params["ca_in_w"], params["ca_in_b"],
                   params["ca_out_w"], params["ca_out_b"])

    # ---- 1) learned-query branch: tiny, batch independent, runs once ----
    qb_args = [params["queries"][0].astype(jnp.float32),
               sa["wq"], sa["wk"], sa["wv"], sa["bq"], sa["bk"], sa["bv"],
               sa["wo"], sa["bo"],
               row(params["nq_w"]), row(params["nq_b"]), ca["wq"], ca["bq"]]
    q1p = pl.pallas_call(
        functools.partial(query_branch_kernel, nheads=nheads),
        out_shape=jax.ShapeDtypeStruct((Q, D), jnp.float32),
        grid_spec=pltpu.PrefetchScalarGridSpec(
            num_scalar_prefetch=0, grid=(1,),
            in_specs=[_full_spec(a.shape) for a in qb_args],
            out_specs=_full_spec((Q, D))),
    )(*qb_args)

    # ---- 2) main kernel: one sequence per grid step ----
    main_args = [enc["wq"], enc["wk"], enc["wv"], enc["bq"], enc["bk"], enc["bv"],
                 enc["wo"], enc["bo"],
                 row(params["n1_w"]), row(params["n1_b"]),
                 params["lin1_w"].T.astype(jnp.bfloat16), row(params["lin1_b"]),
                 params["lin2_w"].T.astype(jnp.bfloat16), row(params["lin2_b"]),
                 row(params["n2_w"]), row(params["n2_b"]),
                 ca["wk"], ca["wv"], ca["bk"], ca["bv"], ca["wo"], ca["bo"],
                 row(params["no_w"]), row(params["no_b"])]

    x2d = x.reshape(B * S, D).astype(jnp.float32)   # free leading-dim reshape

    in_specs = ([pl.BlockSpec((S, D), lambda b: (b, 0)),       # one sequence
                 pl.BlockSpec((Q, D), lambda b: (0, 0))]       # shared queries
                + [_full_spec(a.shape) for a in main_args])    # broadcast weights
    out_specs = [pl.BlockSpec((S, D), lambda b: (b, 0)),
                 pl.BlockSpec((Q, D), lambda b: (b, 0)),
                 pl.BlockSpec((Q, S), lambda b: (b, 0))]
    out_shape = (jax.ShapeDtypeStruct((B * S, D), jnp.float32),
                 jax.ShapeDtypeStruct((B * Q, D), jnp.float32),
                 jax.ShapeDtypeStruct((B * Q, S), jnp.float32))

    # advisory cost estimate so XLA schedules around the fused call
    flops = int(2 * B * S * D * 3 * D          # encoder QKV projections
                + 4 * B * S * S * D            # encoder scores + context
                + 2 * B * S * D * D            # encoder output projection
                + 16 * B * S * D * D           # FFN (two D<->4D linears)
                + 4 * B * S * D * D            # cross-attn K/V projections
                + 4 * B * Q * S * D            # cross-attn scores + context
                + 2 * B * Q * D * D)           # cross-attn output projection
    transcendentals = int(B * nheads * (S * S + Q * S))
    param_bytes = int(sum(int(a.size) * a.dtype.itemsize for a in main_args))
    bytes_accessed = int(4 * (2 * B * S * D + B * Q * D + B * Q * S + Q * D)) + param_bytes

    call = pl.pallas_call(
        functools.partial(boq_main_kernel, nheads=nheads),
        out_shape=out_shape,
        grid_spec=pltpu.PrefetchScalarGridSpec(
            num_scalar_prefetch=0, grid=(B,),
            in_specs=in_specs, out_specs=out_specs),
        compiler_params=pltpu.CompilerParams(
            dimension_semantics=("parallel",),      # shard batch across cores
            vmem_limit_bytes=48 * 1024 * 1024),     # under v7x's 64 MiB VMEM
        cost_estimate=pl.CostEstimate(flops=flops,
                                      transcendentals=transcendentals,
                                      bytes_accessed=bytes_accessed),
    )
    xenc2d, out2d, attn2d = call(x2d, q1p, *main_args)
    return (xenc2d.reshape(B, S, D),
            out2d.reshape(B, Q, D),
            attn2d.reshape(B, Q, S))


# --------------------------------------------------------------------------
# torch-layout parameter init + pure-JAX reference (numeric check)
# --------------------------------------------------------------------------
def init_params(key, D, Q):
    ks = iter(jax.random.split(key, 24))

    def w(shape, scale=0.05):
        return (scale * jax.random.normal(next(ks), shape)).astype(jnp.float32)

    ones = jnp.ones((D,), jnp.float32)
    zeros = jnp.zeros((D,), jnp.float32)
    return {
        "queries": jax.random.normal(next(ks), (1, Q, D)).astype(jnp.float32),
        "enc_in_w": w((3 * D, D)), "enc_in_b": w((3 * D,)),
        "enc_out_w": w((D, D)), "enc_out_b": w((D,)),
        "n1_w": ones, "n1_b": zeros,
        "lin1_w": w((4 * D, D)), "lin1_b": w((4 * D,)),
        "lin2_w": w((D, 4 * D)), "lin2_b": w((D,)),
        "n2_w": ones, "n2_b": zeros,
        "sa_in_w": w((3 * D, D)), "sa_in_b": w((3 * D,)),
        "sa_out_w": w((D, D)), "sa_out_b": w((D,)),
        "nq_w": ones, "nq_b": zeros,
        "ca_in_w": w((3 * D, D)), "ca_in_b": w((3 * D,)),
        "ca_out_w": w((D, D)), "ca_out_b": w((D,)),
        "no_w": ones, "no_b": zeros,
    }


def _ref_mha(q, k, v, in_w, in_b, out_w, out_b, H):
    D = q.shape[-1]
    dh = D // H
    qp = q @ in_w[:D].T + in_b[:D]
    kp = k @ in_w[D:2 * D].T + in_b[D:2 * D]
    vp = v @ in_w[2 * D:].T + in_b[2 * D:]

    def split(t):
        return t.reshape(t.shape[0], H, dh).transpose(1, 0, 2)

    qh, kh, vh = split(qp), split(kp), split(vp)
    s = jnp.einsum("hqd,hkd->hqk", qh, kh) * (1.0 / float(dh) ** 0.5)
    p = jax.nn.softmax(s, axis=-1)
    ctx = jnp.einsum("hqk,hkd->hqd", p, vh).transpose(1, 0, 2).reshape(q.shape[0], D)
    return ctx @ out_w.T + out_b, p.mean(axis=0)


def boq_block_ref(x, params, nheads=NHEADS):
    def one(xb):
        p = params
        sa, _ = _ref_mha(xb, xb, xb, p["enc_in_w"], p["enc_in_b"],
                         p["enc_out_w"], p["enc_out_b"], nheads)
        x1 = _layer_norm(xb + sa, p["n1_w"], p["n1_b"])
        h = jax.nn.relu(x1 @ p["lin1_w"].T + p["lin1_b"])
        x2 = _layer_norm(x1 + (h @ p["lin2_w"].T + p["lin2_b"]), p["n2_w"], p["n2_b"])
        q0 = p["queries"][0]
        qs, _ = _ref_mha(q0, q0, q0, p["sa_in_w"], p["sa_in_b"],
                         p["sa_out_w"], p["sa_out_b"], nheads)
        q1 = _layer_norm(q0 + qs, p["nq_w"], p["nq_b"])
        out, attn = _ref_mha(q1, x2, x2, p["ca_in_w"], p["ca_in_b"],
                             p["ca_out_w"], p["ca_out_b"], nheads)
        return x2, _layer_norm(out, p["no_w"], p["no_b"]), attn

    return jax.vmap(one)(x)


if __name__ == "__main__":
    B, S, D, Q = 2, 16, 32, 8   # batch, seq len, in_dim, num_queries

    key = jax.random.PRNGKey(0)
    kx, kp = jax.random.split(key)
    x = jax.random.normal(kx, (B, S, D)).astype(jnp.float32)
    params = init_params(kp, D, Q)

    x_enc, out, attn = boq_block(x, params)
    jax.block_until_ready((x_enc, out, attn))

    assert x_enc.shape == (B, S, D)
    assert out.shape == (B, Q, D)
    assert attn.shape == (B, Q, S)
    for t in (x_enc, out, attn):
        assert bool(jnp.all(jnp.isfinite(t)))

    rx, ro, ra = boq_block_ref(x, params)
    # bf16 MXU operands with f32 accumulation (+ EUP approx reciprocal in
    # softmax) -> ~1e-2 relative agreement vs the f32 reference.
    assert bool(jnp.allclose(x_enc, rx, rtol=2e-2, atol=2e-2)), float(jnp.max(jnp.abs(x_enc - rx)))
    assert bool(jnp.allclose(out, ro, rtol=2e-2, atol=2e-2)), float(jnp.max(jnp.abs(out - ro)))
    assert bool(jnp.allclose(attn, ra, rtol=2e-2, atol=2e-2)), float(jnp.max(jnp.abs(attn - ra)))

    print("KERNEL_OK")
</pallas_src>

<mosaic_0001>
module attributes {stable_mosaic.version = 11 : i64} {
  func.func @query_branch_kernel(%arg0: i32, %arg1: memref<8x32xf32, #tpu.memory_space<vmem>>, %arg2: memref<32x32xbf16, #tpu.memory_space<vmem>>, %arg3: memref<32x32xbf16, #tpu.memory_space<vmem>>, %arg4: memref<32x32xbf16, #tpu.memory_space<vmem>>, %arg5: memref<1x32xf32, #tpu.memory_space<vmem>>, %arg6: memref<1x32xf32, #tpu.memory_space<vmem>>, %arg7: memref<1x32xf32, #tpu.memory_space<vmem>>, %arg8: memref<32x32xbf16, #tpu.memory_space<vmem>>, %arg9: memref<1x32xf32, #tpu.memory_space<vmem>>, %arg10: memref<1x32xf32, #tpu.memory_space<vmem>>, %arg11: memref<1x32xf32, #tpu.memory_space<vmem>>, %arg12: memref<32x32xbf16, #tpu.memory_space<vmem>>, %arg13: memref<1x32xf32, #tpu.memory_space<vmem>>, %arg14: memref<8x32xf32, #tpu.memory_space<vmem>>) attributes {dimension_semantics = [#tpu.dimension_semantics<arbitrary>], iteration_bounds = array<i64: 1>, scalar_prefetch = 0 : i64, scratch_operands = 0 : i64, tpu.core_type = #tpu.core_type<tc>, window_params = [{pipeline_mode = #tpu.pipeline_mode<synchronous>, transform_indices = @transform_0, window_bounds = array<i64: 8, 32>}, {pipeline_mode = #tpu.pipeline_mode<synchronous>, transform_indices = @transform_1, window_bounds = array<i64: 32, 32>}, {pipeline_mode = #tpu.pipeline_mode<synchronous>, transform_indices = @transform_2, window_bounds = array<i64: 32, 32>}, {pipeline_mode = #tpu.pipeline_mode<synchronous>, transform_indices = @transform_3, window_bounds = array<i64: 32, 32>}, {pipeline_mode = #tpu.pipeline_mode<synchronous>, transform_indices = @transform_4, window_bounds = array<i64: 1, 32>}, {pipeline_mode = #tpu.pipeline_mode<synchronous>, transform_indices = @transform_5, window_bounds = array<i64: 1, 32>}, {pipeline_mode = #tpu.pipeline_mode<synchronous>, transform_indices = @transform_6, window_bounds = array<i64: 1, 32>}, {pipeline_mode = #tpu.pipeline_mode<synchronous>, transform_indices = @transform_7, window_bounds = array<i64: 32, 32>}, {pipeline_mode = #tpu.pipeline_mode<synchronous>, transform_indices = @transform_8, window_bounds = array<i64: 1, 32>}, {pipeline_mode = #tpu.pipeline_mode<synchronous>, transform_indices = @transform_9, window_bounds = array<i64: 1, 32>}, {pipeline_mode = #tpu.pipeline_mode<synchronous>, transform_indices = @transform_10, window_bounds = array<i64: 1, 32>}, {pipeline_mode = #tpu.pipeline_mode<synchronous>, transform_indices = @transform_11, window_bounds = array<i64: 32, 32>}, {pipeline_mode = #tpu.pipeline_mode<synchronous>, transform_indices = @transform_12, window_bounds = array<i64: 1, 32>}, {pipeline_mode = #tpu.pipeline_mode<synchronous>, transform_indices = @transform_13, window_bounds = array<i64: 8, 32>}]} {
    %c0 = arith.constant 0 : index
    %c0_0 = arith.constant 0 : index
    %0 = vector.load %arg1[%c0, %c0_0] : memref<8x32xf32, #tpu.memory_space<vmem>>, vector<8x32xf32>
    %1 = arith.truncf %0 : vector<8x32xf32> to vector<8x32xbf16>
    %c0_1 = arith.constant 0 : index
    %c0_2 = arith.constant 0 : index
    %2 = vector.load %arg2[%c0_1, %c0_2] : memref<32x32xbf16, #tpu.memory_space<vmem>>, vector<32x32xbf16>
    %cst = arith.constant dense<0.000000e+00> : vector<8x32xf32>
    %3 = tpu.matmul %1, %2, %cst {dimension_numbers = #tpu.dot_dimension_numbers<[1], [0], [0], [1], [0, 0, 1, 1], [], []>} : vector<8x32xbf16>, vector<32x32xbf16>, vector<8x32xf32> -> vector<8x32xf32>
    %c0_3 = arith.constant 0 : index
    %c0_4 = arith.constant 0 : index
    %4 = vector.load %arg5[%c0_3, %c0_4] : memref<1x32xf32, #tpu.memory_space<vmem>>, vector<1x32xf32>
    %5 = vector.broadcast %4 : vector<1x32xf32> to vector<8x32xf32>
    %6 = arith.addf %3, %5 : vector<8x32xf32>
    %cst_5 = arith.constant 5.000000e-01 : f32
    %7 = vector.broadcast %cst_5 : f32 to vector<8x32xf32>
    %8 = arith.mulf %6, %7 : vector<8x32xf32>
    %c0_6 = arith.constant 0 : index
    %c0_7 = arith.constant 0 : index
    %9 = vector.load %arg3[%c0_6, %c0_7] : memref<32x32xbf16, #tpu.memory_space<vmem>>, vector<32x32xbf16>
    %cst_8 = arith.constant dense<0.000000e+00> : vector<8x32xf32>
    %10 = tpu.matmul %1, %9, %cst_8 {dimension_numbers = #tpu.dot_dimension_numbers<[1], [0], [0], [1], [0, 0, 1, 1], [], []>} : vector<8x32xbf16>, vector<32x32xbf16>, vector<8x32xf32> -> vector<8x32xf32>
    %c0_9 = arith.constant 0 : index
    %c0_10 = arith.constant 0 : index
    %11 = vector.load %arg6[%c0_9, %c0_10] : memref<1x32xf32, #tpu.memory_space<vmem>>, vector<1x32xf32>
    %12 = vector.broadcast %11 : vector<1x32xf32> to vector<8x32xf32>
    %13 = arith.addf %10, %12 : vector<8x32xf32>
    %c0_11 = arith.constant 0 : index
    %c0_12 = arith.constant 0 : index
    %14 = vector.load %arg4[%c0_11, %c0_12] : memref<32x32xbf16, #tpu.memory_space<vmem>>, vector<32x32xbf16>
    %cst_13 = arith.constant dense<0.000000e+00> : vector<8x32xf32>
    %15 = tpu.matmul %1, %14, %cst_13 {dimension_numbers = #tpu.dot_dimension_numbers<[1], [0], [0], [1], [0, 0, 1, 1], [], []>} : vector<8x32xbf16>, vector<32x32xbf16>, vector<8x32xf32> -> vector<8x32xf32>
    %c0_14 = arith.constant 0 : index
    %c0_15 = arith.constant 0 : index
    %16 = vector.load %arg7[%c0_14, %c0_15] : memref<1x32xf32, #tpu.memory_space<vmem>>, vector<1x32xf32>
    %17 = vector.broadcast %16 : vector<1x32xf32> to vector<8x32xf32>
    %18 = arith.addf %15, %17 : vector<8x32xf32>
    %19 = arith.truncf %8 : vector<8x32xf32> to vector<8x32xbf16>
    %20 = vector.extract_strided_slice %19 {offsets = [0, 0], sizes = [8, 4], strides = [1, 1]} : vector<8x32xbf16> to vector<8x4xbf16>
    %21 = vector.extract_strided_slice %19 {offsets = [0, 4], sizes = [8, 4], strides = [1, 1]} : vector<8x32xbf16> to vector<8x4xbf16>
    %22 = vector.extract_strided_slice %19 {offsets = [0, 8], sizes = [8, 4], strides = [1, 1]} : vector<8x32xbf16> to vector<8x4xbf16>
    %23 = vector.extract_strided_slice %19 {offsets = [0, 12], sizes = [8, 4], strides = [1, 1]} : vector<8x32xbf16> to vector<8x4xbf16>
    %24 = vector.extract_strided_slice %19 {offsets = [0, 16], sizes = [8, 4], strides = [1, 1]} : vector<8x32xbf16> to vector<8x4xbf16>
    %25 = vector.extract_strided_slice %19 {offsets = [0, 20], sizes = [8, 4], strides = [1, 1]} : vector<8x32xbf16> to vector<8x4xbf16>
    %26 = vector.extract_strided_slice %19 {offsets = [0, 24], sizes = [8, 4], strides = [1, 1]} : vector<8x32xbf16> to vector<8x4xbf16>
    %27 = vector.extract_strided_slice %19 {offsets = [0, 28], sizes = [8, 4], strides = [1, 1]} : vector<8x32xbf16> to vector<8x4xbf16>
    %28 = vector.shape_cast %20 : vector<8x4xbf16> to vector<1x8x4xbf16>
    %29 = vector.shape_cast %21 : vector<8x4xbf16> to vector<1x8x4xbf16>
    %30 = vector.shape_cast %22 : vector<8x4xbf16> to vector<1x8x4xbf16>
    %31 = vector.shape_cast %23 : vector<8x4xbf16> to vector<1x8x4xbf16>
    %32 = vector.shape_cast %24 : vector<8x4xbf16> to vector<1x8x4xbf16>
    %33 = vector.shape_cast %25 : vector<8x4xbf16> to vector<1x8x4xbf16>
    %34 = vector.shape_cast %26 : vector<8x4xbf16> to vector<1x8x4xbf16>
    %35 = vector.shape_cast %27 : vector<8x4xbf16> to vector<1x8x4xbf16>
    %36 = tpu.concatenate %28, %29, %30, %31, %32, %33, %34, %35 in 0 : vector<1x8x4xbf16>, vector<1x8x4xbf16>, vector<1x8x4xbf16>, vector<1x8x4xbf16>, vector<1x8x4xbf16>, vector<1x8x4xbf16>, vector<1x8x4xbf16>, vector<1x8x4xbf16> -> vector<8x8x4xbf16>
    %37 = arith.truncf %13 : vector<8x32xf32> to vector<8x32xbf16>
    %38 = vector.extract_strided_slice %37 {offsets = [0, 0], sizes = [8, 4], strides = [1, 1]} : vector<8x32xbf16> to vector<8x4xbf16>
    %39 = vector.extract_strided_slice %37 {offsets = [0, 4], sizes = [8, 4], strides = [1, 1]} : vector<8x32xbf16> to vector<8x4xbf16>
    %40 = vector.extract_strided_slice %37 {offsets = [0, 8], sizes = [8, 4], strides = [1, 1]} : vector<8x32xbf16> to vector<8x4xbf16>
    %41 = vector.extract_strided_slice %37 {offsets = [0, 12], sizes = [8, 4], strides = [1, 1]} : vector<8x32xbf16> to vector<8x4xbf16>
    %42 = vector.extract_strided_slice %37 {offsets = [0, 16], sizes = [8, 4], strides = [1, 1]} : vector<8x32xbf16> to vector<8x4xbf16>
    %43 = vector.extract_strided_slice %37 {offsets = [0, 20], sizes = [8, 4], strides = [1, 1]} : vector<8x32xbf16> to vector<8x4xbf16>
    %44 = vector.extract_strided_slice %37 {offsets = [0, 24], sizes = [8, 4], strides = [1, 1]} : vector<8x32xbf16> to vector<8x4xbf16>
    %45 = vector.extract_strided_slice %37 {offsets = [0, 28], sizes = [8, 4], strides = [1, 1]} : vector<8x32xbf16> to vector<8x4xbf16>
    %46 = vector.shape_cast %38 : vector<8x4xbf16> to vector<1x8x4xbf16>
    %47 = vector.shape_cast %39 : vector<8x4xbf16> to vector<1x8x4xbf16>
    %48 = vector.shape_cast %40 : vector<8x4xbf16> to vector<1x8x4xbf16>
    %49 = vector.shape_cast %41 : vector<8x4xbf16> to vector<1x8x4xbf16>
    %50 = vector.shape_cast %42 : vector<8x4xbf16> to vector<1x8x4xbf16>
    %51 = vector.shape_cast %43 : vector<8x4xbf16> to vector<1x8x4xbf16>
    %52 = vector.shape_cast %44 : vector<8x4xbf16> to vector<1x8x4xbf16>
    %53 = vector.shape_cast %45 : vector<8x4xbf16> to vector<1x8x4xbf16>
    %54 = tpu.concatenate %46, %47, %48, %49, %50, %51, %52, %53 in 0 : vector<1x8x4xbf16>, vector<1x8x4xbf16>, vector<1x8x4xbf16>, vector<1x8x4xbf16>, vector<1x8x4xbf16>, vector<1x8x4xbf16>, vector<1x8x4xbf16>, vector<1x8x4xbf16> -> vector<8x8x4xbf16>
    %55 = arith.truncf %18 : vector<8x32xf32> to vector<8x32xbf16>
    %56 = vector.extract_strided_slice %55 {offsets = [0, 0], sizes = [8, 4], strides = [1, 1]} : vector<8x32xbf16> to vector<8x4xbf16>
    %57 = vector.extract_strided_slice %55 {offsets = [0, 4], sizes = [8, 4], strides = [1, 1]} : vector<8x32xbf16> to vector<8x4xbf16>
    %58 = vector.extract_strided_slice %55 {offsets = [0, 8], sizes = [8, 4], strides = [1, 1]} : vector<8x32xbf16> to vector<8x4xbf16>
    %59 = vector.extract_strided_slice %55 {offsets = [0, 12], sizes = [8, 4], strides = [1, 1]} : vector<8x32xbf16> to vector<8x4xbf16>
    %60 = vector.extract_strided_slice %55 {offsets = [0, 16], sizes = [8, 4], strides = [1, 1]} : vector<8x32xbf16> to vector<8x4xbf16>
    %61 = vector.extract_strided_slice %55 {offsets = [0, 20], sizes = [8, 4], strides = [1, 1]} : vector<8x32xbf16> to vector<8x4xbf16>
    %62 = vector.extract_strided_slice %55 {offsets = [0, 24], sizes = [8, 4], strides = [1, 1]} : vector<8x32xbf16> to vector<8x4xbf16>
    %63 = vector.extract_strided_slice %55 {offsets = [0, 28], sizes = [8, 4], strides = [1, 1]} : vector<8x32xbf16> to vector<8x4xbf16>
    %64 = vector.shape_cast %56 : vector<8x4xbf16> to vector<1x8x4xbf16>
    %65 = vector.shape_cast %57 : vector<8x4xbf16> to vector<1x8x4xbf16>
    %66 = vector.shape_cast %58 : vector<8x4xbf16> to vector<1x8x4xbf16>
    %67 = vector.shape_cast %59 : vector<8x4xbf16> to vector<1x8x4xbf16>
    %68 = vector.shape_cast %60 : vector<8x4xbf16> to vector<1x8x4xbf16>
    %69 = vector.shape_cast %61 : vector<8x4xbf16> to vector<1x8x4xbf16>
    %70 = vector.shape_cast %62 : vector<8x4xbf16> to vector<1x8x4xbf16>
    %71 = vector.shape_cast %63 : vector<8x4xbf16> to vector<1x8x4xbf16>
    %72 = tpu.concatenate %64, %65, %66, %67, %68, %69, %70, %71 in 0 : vector<1x8x4xbf16>, vector<1x8x4xbf16>, vector<1x8x4xbf16>, vector<1x8x4xbf16>, vector<1x8x4xbf16>, vector<1x8x4xbf16>, vector<1x8x4xbf16>, vector<1x8x4xbf16> -> vector<8x8x4xbf16>
    "tpu.trace_start"() <{level = 10 : i32, message = "hqe,hke->hqk"}> : () -> ()
    %cst_16 = arith.constant dense<0.000000e+00> : vector<8x8x8xf32>
    %73 = tpu.matmul %36, %54, %cst_16 {dimension_numbers = #tpu.dot_dimension_numbers<[2], [2], [1], [1], [0, 0, 0, 1, 1, 1], [0], [0]>} : vector<8x8x4xbf16>, vector<8x8x4xbf16>, vector<8x8x8xf32> -> vector<8x8x8xf32>
    "tpu.trace_stop"() : () -> ()
    %cst_17 = arith.constant dense<0xFF800000> : vector<8x8xf32>
    %74 = vector.multi_reduction <maximumf>, %73, %cst_17 [2] : vector<8x8x8xf32> to vector<8x8xf32>
    %75 = vector.shape_cast %74 : vector<8x8xf32> to vector<8x8x1xf32>
    %76 = vector.broadcast %75 : vector<8x8x1xf32> to vector<8x8x8xf32>
    %77 = arith.subf %73, %76 : vector<8x8x8xf32>
    %78 = math.exp %77 : vector<8x8x8xf32>
    %cst_18 = arith.constant dense<0.000000e+00> : vector<8x8xf32>
    %79 = vector.multi_reduction <add>, %78, %cst_18 [2] : vector<8x8x8xf32> to vector<8x8xf32>
    %80 = vector.shape_cast %79 : vector<8x8xf32> to vector<8x8x1xf32>
    %81 = tpu.reciprocal %80 {approx = true} : vector<8x8x1xf32> -> vector<8x8x1xf32>
    %82 = vector.broadcast %81 : vector<8x8x1xf32> to vector<8x8x8xf32>
    %83 = arith.mulf %78, %82 : vector<8x8x8xf32>
    %84 = arith.truncf %83 : vector<8x8x8xf32> to vector<8x8x8xbf16>
    "tpu.trace_start"() <{level = 10 : i32, message = "hqk,hke->hqe"}> : () -> ()
    %cst_19 = arith.constant dense<0.000000e+00> : vector<8x8x4xf32>
    %85 = tpu.matmul %84, %72, %cst_19 {dimension_numbers = #tpu.dot_dimension_numbers<[2], [1], [1], [2], [0, 0, 0, 1, 1, 2], [0], [0]>} : vector<8x8x8xbf16>, vector<8x8x4xbf16>, vector<8x8x4xf32> -> vector<8x8x4xf32>
    "tpu.trace_stop"() : () -> ()
    %86 = vector.extract_strided_slice %85 {offsets = [0, 0, 0], sizes = [1, 8, 4], strides = [1, 1, 1]} : vector<8x8x4xf32> to vector<1x8x4xf32>
    %87 = vector.shape_cast %86 : vector<1x8x4xf32> to vector<8x4xf32>
    %88 = vector.extract_strided_slice %85 {offsets = [1, 0, 0], sizes = [1, 8, 4], strides = [1, 1, 1]} : vector<8x8x4xf32> to vector<1x8x4xf32>
    %89 = vector.shape_cast %88 : vector<1x8x4xf32> to vector<8x4xf32>
    %90 = vector.extract_strided_slice %85 {offsets = [2, 0, 0], sizes = [1, 8, 4], strides = [1, 1, 1]} : vector<8x8x4xf32> to vector<1x8x4xf32>
    %91 = vector.shape_cast %90 : vector<1x8x4xf32> to vector<8x4xf32>
    %92 = vector.extract_strided_slice %85 {offsets = [3, 0, 0], sizes = [1, 8, 4], strides = [1, 1, 1]} : vector<8x8x4xf32> to vector<1x8x4xf32>
    %93 = vector.shape_cast %92 : vector<1x8x4xf32> to vector<8x4xf32>
    %94 = vector.extract_strided_slice %85 {offsets = [4, 0, 0], sizes = [1, 8, 4], strides = [1, 1, 1]} : vector<8x8x4xf32> to vector<1x8x4xf32>
    %95 = vector.shape_cast %94 : vector<1x8x4xf32> to vector<8x4xf32>
    %96 = vector.extract_strided_slice %85 {offsets = [5, 0, 0], sizes = [1, 8, 4], strides = [1, 1, 1]} : vector<8x8x4xf32> to vector<1x8x4xf32>
    %97 = vector.shape_cast %96 : vector<1x8x4xf32> to vector<8x4xf32>
    %98 = vector.extract_strided_slice %85 {offsets = [6, 0, 0], sizes = [1, 8, 4], strides = [1, 1, 1]} : vector<8x8x4xf32> to vector<1x8x4xf32>
    %99 = vector.shape_cast %98 : vector<1x8x4xf32> to vector<8x4xf32>
    %100 = vector.extract_strided_slice %85 {offsets = [7, 0, 0], sizes = [1, 8, 4], strides = [1, 1, 1]} : vector<8x8x4xf32> to vector<1x8x4xf32>
    %101 = vector.shape_cast %100 : vector<1x8x4xf32> to vector<8x4xf32>
    %102 = tpu.concatenate %87, %89, %91, %93, %95, %97, %99, %101 in 1 : vector<8x4xf32>, vector<8x4xf32>, vector<8x4xf32>, vector<8x4xf32>, vector<8x4xf32>, vector<8x4xf32>, vector<8x4xf32>, vector<8x4xf32> -> vector<8x32xf32>
    %103 = arith.truncf %102 : vector<8x32xf32> to vector<8x32xbf16>
    %c0_20 = arith.constant 0 : index
    %c0_21 = arith.constant 0 : index
    %104 = vector.load %arg8[%c0_20, %c0_21] : memref<32x32xbf16, #tpu.memory_space<vmem>>, vector<32x32xbf16>
    %cst_22 = arith.constant dense<0.000000e+00> : vector<8x32xf32>
    %105 = tpu.matmul %103, %104, %cst_22 {dimension_numbers = #tpu.dot_dimension_numbers<[1], [0], [0], [1], [0, 0, 1, 1], [], []>} : vector<8x32xbf16>, vector<32x32xbf16>, vector<8x32xf32> -> vector<8x32xf32>
    %c0_23 = arith.constant 0 : index
    %c0_24 = arith.constant 0 : index
    %106 = vector.load %arg9[%c0_23, %c0_24] : memref<1x32xf32, #tpu.memory_space<vmem>>, vector<1x32xf32>
    %107 = vector.broadcast %106 : vector<1x32xf32> to vector<8x32xf32>
    %108 = arith.addf %105, %107 : vector<8x32xf32>
    %109 = arith.addf %0, %108 : vector<8x32xf32>
    %c0_25 = arith.constant 0 : index
    %c0_26 = arith.constant 0 : index
    %110 = vector.load %arg10[%c0_25, %c0_26] : memref<1x32xf32, #tpu.memory_space<vmem>>, vector<1x32xf32>
    %c0_27 = arith.constant 0 : index
    %c0_28 = arith.constant 0 : index
    %111 = vector.load %arg11[%c0_27, %c0_28] : memref<1x32xf32, #tpu.memory_space<vmem>>, vector<1x32xf32>
    %cst_29 = arith.constant dense<0.000000e+00> : vector<8xf32>
    %112 = vector.multi_reduction <add>, %109, %cst_29 [1] : vector<8x32xf32> to vector<8xf32>
    %113 = vector.shape_cast %112 : vector<8xf32> to vector<8x1xf32>
    %cst_30 = arith.constant 3.200000e+01 : f32
    %114 = vector.broadcast %cst_30 : f32 to vector<8x1xf32>
    %115 = arith.divf %113, %114 : vector<8x1xf32>
    %116 = vector.broadcast %115 : vector<8x1xf32> to vector<8x32xf32>
    %117 = arith.subf %109, %116 : vector<8x32xf32>
    %118 = arith.mulf %117, %117 : vector<8x32xf32>
    %cst_31 = arith.constant dense<0.000000e+00> : vector<8xf32>
    %119 = vector.multi_reduction <add>, %118, %cst_31 [1] : vector<8x32xf32> to vector<8xf32>
    %120 = vector.shape_cast %119 : vector<8xf32> to vector<8x1xf32>
    %cst_32 = arith.constant 3.200000e+01 : f32
    %121 = vector.broadcast %cst_32 : f32 to vector<8x1xf32>
    %122 = arith.divf %120, %121 : vector<8x1xf32>
    %123 = vector.broadcast %115 : vector<8x1xf32> to vector<8x32xf32>
    %124 = arith.subf %109, %123 : vector<8x32xf32>
    %cst_33 = arith.constant 9.99999974E-6 : f32
    %125 = vector.broadcast %cst_33 : f32 to vector<8x1xf32>
    %126 = arith.addf %122, %125 : vector<8x1xf32>
    %127 = math.rsqrt %126 : vector<8x1xf32>
    %128 = vector.broadcast %127 : vector<8x1xf32> to vector<8x32xf32>
    %129 = arith.mulf %124, %128 : vector<8x32xf32>
    %130 = vector.broadcast %110 : vector<1x32xf32> to vector<8x32xf32>
    %131 = arith.mulf %129, %130 : vector<8x32xf32>
    %132 = vector.broadcast %111 : vector<1x32xf32> to vector<8x32xf32>
    %133 = arith.addf %131, %132 : vector<8x32xf32>
    %134 = arith.truncf %133 : vector<8x32xf32> to vector<8x32xbf16>
    %c0_34 = arith.constant 0 : index
    %c0_35 = arith.constant 0 : index
    %135 = vector.load %arg12[%c0_34, %c0_35] : memref<32x32xbf16, #tpu.memory_space<vmem>>, vector<32x32xbf16>
    %cst_36 = arith.constant dense<0.000000e+00> : vector<8x32xf32>
    %136 = tpu.matmul %134, %135, %cst_36 {dimension_numbers = #tpu.dot_dimension_numbers<[1], [0], [0], [1], [0, 0, 1, 1], [], []>} : vector<8x32xbf16>, vector<32x32xbf16>, vector<8x32xf32> -> vector<8x32xf32>
    %c0_37 = arith.constant 0 : index
    %c0_38 = arith.constant 0 : index
    %137 = vector.load %arg13[%c0_37, %c0_38] : memref<1x32xf32, #tpu.memory_space<vmem>>, vector<1x32xf32>
    %138 = vector.broadcast %137 : vector<1x32xf32> to vector<8x32xf32>
    %139 = arith.addf %136, %138 : vector<8x32xf32>
    %c0_39 = arith.constant 0 : index
    %c0_40 = arith.constant 0 : index
    %140 = vector.load %arg14[%c0_39, %c0_40] : memref<8x32xf32, #tpu.memory_space<vmem>>, vector<8x32xf32>
    tpu.vector_store %arg14[%c0_39, %c0_40], %139 {strides = array<i32>} : memref<8x32xf32, #tpu.memory_space<vmem>>, vector<8x32xf32>,
    return
  }
  func.func @transform_0(%arg0: i32) -> (i32, i32) {
    %c0_i32 = arith.constant 0 : i32
    %c0_i32_0 = arith.constant 0 : i32
    %c0_i32_1 = arith.constant 0 : i32
    return %c0_i32, %c0_i32_0 : i32, i32
  }
  func.func @transform_1(%arg0: i32) -> (i32, i32) {
    %c0_i32 = arith.constant 0 : i32
    %c0_i32_0 = arith.constant 0 : i32
    %c0_i32_1 = arith.constant 0 : i32
    return %c0_i32, %c0_i32_0 : i32, i32
  }
  func.func @transform_2(%arg0: i32) -> (i32, i32) {
    %c0_i32 = arith.constant 0 : i32
    %c0_i32_0 = arith.constant 0 : i32
    %c0_i32_1 = arith.constant 0 : i32
    return %c0_i32, %c0_i32_0 : i32, i32
  }
  func.func @transform_3(%arg0: i32) -> (i32, i32) {
    %c0_i32 = arith.constant 0 : i32
    %c0_i32_0 = arith.constant 0 : i32
    %c0_i32_1 = arith.constant 0 : i32
    return %c0_i32, %c0_i32_0 : i32, i32
  }
  func.func @transform_4(%arg0: i32) -> (i32, i32) {
    %c0_i32 = arith.constant 0 : i32
    %c0_i32_0 = arith.constant 0 : i32
    %c0_i32_1 = arith.constant 0 : i32
    return %c0_i32, %c0_i32_0 : i32, i32
  }
  func.func @transform_5(%arg0: i32) -> (i32, i32) {
    %c0_i32 = arith.constant 0 : i32
    %c0_i32_0 = arith.constant 0 : i32
    %c0_i32_1 = arith.constant 0 : i32
    return %c0_i32, %c0_i32_0 : i32, i32
  }
  func.func @transform_6(%arg0: i32) -> (i32, i32) {
    %c0_i32 = arith.constant 0 : i32
    %c0_i32_0 = arith.constant 0 : i32
    %c0_i32_1 = arith.constant 0 : i32
    return %c0_i32, %c0_i32_0 : i32, i32
  }
  func.func @transform_7(%arg0: i32) -> (i32, i32) {
    %c0_i32 = arith.constant 0 : i32
    %c0_i32_0 = arith.constant 0 : i32
    %c0_i32_1 = arith.constant 0 : i32
    return %c0_i32, %c0_i32_0 : i32, i32
  }
  func.func @transform_8(%arg0: i32) -> (i32, i32) {
    %c0_i32 = arith.constant 0 : i32
    %c0_i32_0 = arith.constant 0 : i32
    %c0_i32_1 = arith.constant 0 : i32
    return %c0_i32, %c0_i32_0 : i32, i32
  }
  func.func @transform_9(%arg0: i32) -> (i32, i32) {
    %c0_i32 = arith.constant 0 : i32
    %c0_i32_0 = arith.constant 0 : i32
    %c0_i32_1 = arith.constant 0 : i32
    return %c0_i32, %c0_i32_0 : i32, i32
  }
  func.func @transform_10(%arg0: i32) -> (i32, i32) {
    %c0_i32 = arith.constant 0 : i32
    %c0_i32_0 = arith.constant 0 : i32
    %c0_i32_1 = arith.constant 0 : i32
    return %c0_i32, %c0_i32_0 : i32, i32
  }
  func.func @transform_11(%arg0: i32) -> (i32, i32) {
    %c0_i32 = arith.constant 0 : i32
    %c0_i32_0 = arith.constant 0 : i32
    %c0_i32_1 = arith.constant 0 : i32
    return %c0_i32, %c0_i32_0 : i32, i32
  }
  func.func @transform_12(%arg0: i32) -> (i32, i32) {
    %c0_i32 = arith.constant 0 : i32
    %c0_i32_0 = arith.constant 0 : i32
    %c0_i32_1 = arith.constant 0 : i32
    return %c0_i32, %c0_i32_0 : i32, i32
  }
  func.func @transform_13(%arg0: i32) -> (i32, i32) {
    %c0_i32 = arith.constant 0 : i32
    %c0_i32_0 = arith.constant 0 : i32
    %c0_i32_1 = arith.constant 0 : i32
    return %c0_i32, %c0_i32_0 : i32, i32
  }
}

</mosaic_0001>

<llo_original>
// kernel: tpu_custom_call.1
$region0: #{tpu_custom_call.1}
  #allocation0 [shape = 'u32[]', space=smem, size = 0x4, offset = 0x4, fixed_abs, tag = 'smem constant byte address 0x4 - core index']
  #allocation1 [shape = 'u32[144,128]{1,0:T(1,128)}', space=vmem, size = 0x12000, scoped, tag = 'internal scratch']
  %s0 = inlined_call_operand.hbm [shape: f32[8,32], index: 0, kind: input, shape index: {}]
  %s1 = inlined_call_operand.hbm [shape: bf16[32,32], index: 1, kind: input, shape index: {}]
  %s2 = inlined_call_operand.hbm [shape: bf16[32,32], index: 2, kind: input, shape index: {}]
  %s3 = inlined_call_operand.hbm [shape: bf16[32,32], index: 3, kind: input, shape index: {}]
  %s4 = inlined_call_operand.vmem [shape: f32[1,32], index: 4, kind: input, shape index: {}]
  %s5 = inlined_call_operand.vmem [shape: f32[1,32], index: 5, kind: input, shape index: {}]
  %s6 = inlined_call_operand.vmem [shape: f32[1,32], index: 6, kind: input, shape index: {}]
  %s7 = inlined_call_operand.hbm [shape: bf16[32,32], index: 7, kind: input, shape index: {}]
  %s8 = inlined_call_operand.vmem [shape: f32[1,32], index: 8, kind: input, shape index: {}]
  %s9 = inlined_call_operand.hbm [shape: f32[1,32], index: 9, kind: input, shape index: {}]
  %s10 = inlined_call_operand.hbm [shape: f32[1,32], index: 10, kind: input, shape index: {}]
  %s11 = inlined_call_operand.vmem [shape: bf16[32,32], index: 11, kind: input, shape index: {}]
  %s12 = inlined_call_operand.vmem [shape: f32[1,32], index: 12, kind: input, shape index: {}]
  %s13 = inlined_call_operand.hbm [shape: f32[8,32], index: 13, kind: output, shape index: {}]
  %s14 = sld [smem:[#allocation0]]
  $region90: #{tpu_custom_call.1} parent=0
    _
  %s16 = ssub.s32 1, %s14
  %s17 = scalar_select 0, %s16, %s14
  $region1: #{tpu_custom_call.1} parent=0
    #allocation2 [shape = 'u8[4096]{0}', space=vmem, size = 0x1000, scoped, tag = 'input window, operand 0, single buffered']
    #allocation3 [shape = 's32[1]{0}', space=sflag, size = 0x4, scoped, tag = 'scoped memory for tpu_custom_call.1']
    #allocation4 [shape = 's32[1]{0}', space=sflag, size = 0x4, scoped, tag = 'scoped memory for tpu_custom_call.1']
    #allocation5 [shape = 'u8[8192]{0}', space=vmem, size = 0x2000, scoped, tag = 'input window, operand 1, single buffered']
    #allocation6 [shape = 's32[1]{0}', space=sflag, size = 0x4, scoped, tag = 'scoped memory for tpu_custom_call.1']
    #allocation7 [shape = 'u8[8192]{0}', space=vmem, size = 0x2000, scoped, tag = 'input window, operand 2, single buffered']
    #allocation8 [shape = 'u8[8192]{0}', space=vmem, size = 0x2000, scoped, tag = 'input window, operand 3, single buffered']
    #allocation9 [shape = 's32[1]{0}', space=sflag, size = 0x4, scoped, tag = 'scoped memory for tpu_custom_call.1']
    #allocation10 [shape = 'u8[8192]{0}', space=vmem, size = 0x2000, scoped, tag = 'input window, operand 7, single buffered']
    #allocation11 [shape = 'u8[512]{0}', space=vmem, size = 0x400, scoped, tag = 'input window, operand 9, single buffered']
    #allocation12 [shape = 's32[1]{0}', space=sflag, size = 0x4, scoped, tag = 'scoped memory for tpu_custom_call.1']
    #allocation13 [shape = 'u8[512]{0}', space=vmem, size = 0x400, scoped, tag = 'input window, operand 10, single buffered']
    #allocation14 [shape = 'u8[4096]{0}', space=vmem, size = 0x1000, scoped, tag = 'output window, operand 0, single buffered']
    %18 = vsyncpa [#allocation3], 0
    %19 = vsyncpa [#allocation6], 0
    %20 = vsyncpa [#allocation9], 0
    %21 = vsyncpa [#allocation12], 0
    %22 = vsyncpa [#allocation4], 0
    // Predicated region
    $region2: #{tpu_custom_call.1} parent=1 // pred_check
      _
    $region3: #{tpu_custom_call.1} parent=1 // pred_check_branch
      %24 = sbr.rel (0) target = $region5
    $region4: #{tpu_custom_call.1} parent=1 // pred_region
      %s26 = ssub.s32 128, 128
      %27 = vsyncadd [#allocation3], %s26
      %s29 = sshll.u32 [#allocation2], 4
      %s30 = int_to_ptr.vmem [resolvable:$true] %s29
      %32 = dma.hbm_to_vmem [thread:$0]  %s0, 128, %s30, [#allocation3]
    $region5: #{tpu_custom_call.1} parent=1 // pred_fallthru
      _
    // Predicated region
    $region6: #{tpu_custom_call.1} parent=1 // pred_check
      _
    $region7: #{tpu_custom_call.1} parent=1 // pred_check_branch
      %34 = sbr.rel (0) target = $region9
    $region8: #{tpu_custom_call.1} parent=1 // pred_region
      %s36 = ssub.s32 256, 256
      %37 = vsyncadd [#allocation6], %s36
      %s38 = sshll.u32 [#allocation5], 4
      %s39 = int_to_ptr.vmem [resolvable:$true] %s38
      %44 = dma.hbm_to_vmem [thread:$0]  %s1, 256, %s39, [#allocation6], 64, 64, 4
    $region9: #{tpu_custom_call.1} parent=1 // pred_fallthru
      _
    // Predicated region
    $region10: #{tpu_custom_call.1} parent=1 // pred_check
      _
    $region11: #{tpu_custom_call.1} parent=1 // pred_check_branch
      %46 = sbr.rel (0) target = $region13
    $region12: #{tpu_custom_call.1} parent=1 // pred_region
      %s48 = ssub.s32 256, 256
      %49 = vsyncadd [#allocation6], %s48
      %s50 = sshll.u32 [#allocation7], 4
      %s51 = int_to_ptr.vmem [resolvable:$true] %s50
      %56 = dma.hbm_to_vmem [thread:$0]  %s2, 256, %s51, [#allocation6], 64, 64, 4
    $region13: #{tpu_custom_call.1} parent=1 // pred_fallthru
      _
    // Predicated region
    $region14: #{tpu_custom_call.1} parent=1 // pred_check
      _
    $region15: #{tpu_custom_call.1} parent=1 // pred_check_branch
      %58 = sbr.rel (0) target = $region17
    $region16: #{tpu_custom_call.1} parent=1 // pred_region
      %s60 = ssub.s32 256, 256
      %61 = vsyncadd [#allocation9], %s60
      %s62 = sshll.u32 [#allocation8], 4
      %s63 = int_to_ptr.vmem [resolvable:$true] %s62
      %68 = dma.hbm_to_vmem [thread:$0]  %s3, 256, %s63, [#allocation9], 64, 64, 4
    $region17: #{tpu_custom_call.1} parent=1 // pred_fallthru
      _
    // Predicated region
    $region18: #{tpu_custom_call.1} parent=1 // pred_check
      _
    $region19: #{tpu_custom_call.1} parent=1 // pred_check_branch
      %70 = sbr.rel (0) target = $region21
    $region20: #{tpu_custom_call.1} parent=1 // pred_region
      _
    $region21: #{tpu_custom_call.1} parent=1 // pred_fallthru
      _
    // Predicated region
    $region22: #{tpu_custom_call.1} parent=1 // pred_check
      _
    $region23: #{tpu_custom_call.1} parent=1 // pred_check_branch
      %72 = sbr.rel (0) target = $region25
    $region24: #{tpu_custom_call.1} parent=1 // pred_region
      _
    $region25: #{tpu_custom_call.1} parent=1 // pred_fallthru
      _
    // Predicated region
    $region26: #{tpu_custom_call.1} parent=1 // pred_check
      _
    $region27: #{tpu_custom_call.1} parent=1 // pred_check_branch
      %74 = sbr.rel (0) target = $region29
    $region28: #{tpu_custom_call.1} parent=1 // pred_region
      _
    $region29: #{tpu_custom_call.1} parent=1 // pred_fallthru
      _
    // Predicated region
    $region30: #{tpu_custom_call.1} parent=1 // pred_check
      _
    $region31: #{tpu_custom_call.1} parent=1 // pred_check_branch
      %76 = sbr.rel (0) target = $region33
    $region32: #{tpu_custom_call.1} parent=1 // pred_region
      %s78 = ssub.s32 256, 256
      %79 = vsyncadd [#allocation9], %s78
      %s80 = sshll.u32 [#allocation10], 4
      %s81 = int_to_ptr.vmem [resolvable:$true] %s80
      %86 = dma.hbm_to_vmem [thread:$0]  %s7, 256, %s81, [#allocation9], 64, 64, 4
    $region33: #{tpu_custom_call.1} parent=1 // pred_fallthru
      _
    // Predicated region
    $region34: #{tpu_custom_call.1} parent=1 // pred_check
      _
    $region35: #{tpu_custom_call.1} parent=1 // pred_check_branch
      %88 = sbr.rel (0) target = $region37
    $region36: #{tpu_custom_call.1} parent=1 // pred_region
      _
    $region37: #{tpu_custom_call.1} parent=1 // pred_fallthru
      _
    // Predicated region
    $region38: #{tpu_custom_call.1} parent=1 // pred_check
      _
    $region39: #{tpu_custom_call.1} parent=1 // pred_check_branch
      %90 = sbr.rel (0) target = $region41
    $region40: #{tpu_custom_call.1} parent=1 // pred_region
      %s92 = ssub.s32 16, 16
      %93 = vsyncadd [#allocation12], %s92
      %s95 = sshll.u32 [#allocation11], 4
      %s96 = int_to_ptr.vmem [resolvable:$true] %s95
      %98 = dma.hbm_to_vmem [thread:$0]  %s9, 16, %s96, [#allocation12]
    $region41: #{tpu_custom_call.1} parent=1 // pred_fallthru
      _
    // Predicated region
    $region42: #{tpu_custom_call.1} parent=1 // pred_check
      _
    $region43: #{tpu_custom_call.1} parent=1 // pred_check_branch
      %100 = sbr.rel (0) target = $region45
    $region44: #{tpu_custom_call.1} parent=1 // pred_region
      %s102 = ssub.s32 16, 16
      %103 = vsyncadd [#allocation12], %s102
      %s105 = sshll.u32 [#allocation13], 4
      %s106 = int_to_ptr.vmem [resolvable:$true] %s105
      %108 = dma.hbm_to_vmem [thread:$0]  %s10, 16, %s106, [#allocation12]
    $region45: #{tpu_custom_call.1} parent=1 // pred_fallthru
      _
    // Predicated region
    $region46: #{tpu_custom_call.1} parent=1 // pred_check
      _
    $region47: #{tpu_custom_call.1} parent=1 // pred_check_branch
      %110 = sbr.rel (0) target = $region49
    $region48: #{tpu_custom_call.1} parent=1 // pred_region
      _
    $region49: #{tpu_custom_call.1} parent=1 // pred_fallthru
      _
    // Predicated region
    $region50: #{tpu_custom_call.1} parent=1 // pred_check
      _
    $region51: #{tpu_custom_call.1} parent=1 // pred_check_branch
      %112 = sbr.rel (0) target = $region53
    $region52: #{tpu_custom_call.1} parent=1 // pred_region
      _
    $region53: #{tpu_custom_call.1} parent=1 // pred_fallthru
      _
    // Predicated region
    $region54: #{tpu_custom_call.1} parent=1 // pred_check
      _
    $region55: #{tpu_custom_call.1} parent=1 // pred_check_branch
      %114 = sbr.rel (0) target = $region57
    $region56: #{tpu_custom_call.1} parent=1 // pred_region
      %115 = dma.done [#allocation3], 128
    $region57: #{tpu_custom_call.1} parent=1 // pred_fallthru
      _
    // Predicated region
    $region58: #{tpu_custom_call.1} parent=1 // pred_check
      _
    $region59: #{tpu_custom_call.1} parent=1 // pred_check_branch
      %117 = sbr.rel (0) target = $region61
    $region60: #{tpu_custom_call.1} parent=1 // pred_region
      %118 = dma.done [#allocation6], 256
    $region61: #{tpu_custom_call.1} parent=1 // pred_fallthru
      _
    // Predicated region
    $region62: #{tpu_custom_call.1} parent=1 // pred_check
      _
    $region63: #{tpu_custom_call.1} parent=1 // pred_check_branch
      %120 = sbr.rel (0) target = $region65
    $region64: #{tpu_custom_call.1} parent=1 // pred_region
      %121 = dma.done [#allocation6], 256
    $region65: #{tpu_custom_call.1} parent=1 // pred_fallthru
      _
    // Predicated region
    $region66: #{tpu_custom_call.1} parent=1 // pred_check
      _
    $region67: #{tpu_custom_call.1} parent=1 // pred_check_branch
      %123 = sbr.rel (0) target = $region69
    $region68: #{tpu_custom_call.1} parent=1 // pred_region
      %124 = dma.done [#allocation9], 256
    $region69: #{tpu_custom_call.1} parent=1 // pred_fallthru
      _
    // Predicated region
    $region70: #{tpu_custom_call.1} parent=1 // pred_check
      _
    $region71: #{tpu_custom_call.1} parent=1 // pred_check_branch
      %126 = sbr.rel (0) target = $region73
    $region72: #{tpu_custom_call.1} parent=1 // pred_region
      %127 = dma.done [#allocation9], 256
    $region73: #{tpu_custom_call.1} parent=1 // pred_fallthru
      _
    // Predicated region
    $region74: #{tpu_custom_call.1} parent=1 // pred_check
      _
    $region75: #{tpu_custom_call.1} parent=1 // pred_check_branch
      %129 = sbr.rel (0) target = $region77
    $region76: #{tpu_custom_call.1} parent=1 // pred_region
      %130 = dma.done [#allocation12], 16
    $region77: #{tpu_custom_call.1} parent=1 // pred_fallthru
      _
    // Predicated region
    $region78: #{tpu_custom_call.1} parent=1 // pred_check
      _
    $region79: #{tpu_custom_call.1} parent=1 // pred_check_branch
      %132 = sbr.rel (0) target = $region81
    $region80: #{tpu_custom_call.1} parent=1 // pred_region
      %133 = dma.done [#allocation12], 16
    $region81: #{tpu_custom_call.1} parent=1 // pred_fallthru
      _
    %v135 = vld [vmem:[#allocation2] sm:$0xff]
    %v136 = vpack.c.bf16 %v135, %v135
    %v137 = vld [vmem:[#allocation5] sm:$0xf]
    %v138 = vld [vmem:[#allocation5 + $0x4] sm:$0xf]
    %v139 = vld [vmem:[#allocation5 + $0x8] sm:$0xf]
    %v140 = vld [vmem:[#allocation5 + $0xc] sm:$0xf]
    %v141 = vld [vmem:[%s4] sm:$0x1]
    %v143 = vlaneseq
    %v144 = vshrl.u32 %v143, 7
    %v145 = vsub.s32 0, %v144
    %v146 = vrot.slane %v141, %v145
    %v152 = vunpack.c.l.b16 %v137
    %v153 = vunpack.c.l.b16 %v138
    %v154 = vunpack.c.l.b16 %v139
    %v155 = vunpack.c.l.b16 %v140
    %v156 = vpack.c.b16 %v153, %v152
    %v157 = vpack.c.b16 %v155, %v154
    %vm160 = vcmask 261120
    %v162 = vsel %vm160, %v136, 0
    %164 = vmatprep.subr.bf16.mxu0 0
    %165 = vmatpush1.bf16.msra.mxu0 0
    %166 = vmatprep.subr.bf16.mxu0 0
    %167 = vmatpush1.bf16.msra.mxu0 0
    %168 = vmatprep.subr.bf16.mxu0 0
    %169 = vmatpush1.bf16.msra.mxu0 0
    %170 = vmatprep.subr.bf16.mxu0 0
    %171 = vmatpush1.bf16.msra.mxu0 0
    %172 = vmatprep.subr.bf16.mxu0 0
    %173 = vmatpush1.bf16.msra.mxu0 0
    %174 = vmatprep.subr.bf16.mxu0 0
    %175 = vmatpush1.bf16.msra.mxu0 0
    %176 = vmatprep.subr.bf16.mxu0 0
    %177 = vmatpush1.bf16.msra.mxu0 %v157
    %178 = vmatprep.subr.bf16.mxu0 0
    %179 = vmatpush1.bf16.msra.mxu0 %v156
    %180 = vmatprep.subr.bf16.mxu0 0
    %181 = vmatpush2.bf16.msra.mxu0 0
    %182 = vmatprep.subr.bf16.mxu0 0
    %183 = vmatpush2.bf16.msra.mxu0 0
    %184 = vmatprep.subr.bf16.mxu0 0
    %185 = vmatpush2.bf16.msra.mxu0 0
    %186 = vmatprep.subr.bf16.mxu0 0
    %187 = vmatpush2.bf16.msra.mxu0 0
    %188 = vmatprep.subr.bf16.mxu0 0
    %189 = vmatpush2.bf16.msra.mxu0 0
    %190 = vmatprep.subr.bf16.mxu0 0
    %191 = vmatpush2.bf16.msra.mxu0 0
    %192 = vmatprep.subr.bf16.mxu0 0
    %193 = vmatpush2.bf16.msra.mxu0 0
    %194 = vmatprep.subr.bf16.mxu0 0
    %195 = vmatpush2.bf16.msra.mxu0 0
    %196 = vmatprep.mubr.bf16.mxu0 0
    %197 = vmatmul.mubr.bf16.gmra.mxu0 %v162
    %v198 = vpop.f32.mrf.mxu0
    %v199 = vadd.f32 %v146, %v198
    %v200 = vpop.f32.mrf.mxu0
    %v201 = vpop.f32.mrf.mxu0
    %v202 = vpop.f32.mrf.mxu0
    %203 = vdwg.mxu0
    %v204 = vmul.f32 %v199, 0.5
    %v205 = vld [vmem:[#allocation7] sm:$0xf]
    %v206 = vld [vmem:[#allocation7 + $0x4] sm:$0xf]
    %v207 = vld [vmem:[#allocation7 + $0x8] sm:$0xf]
    %v208 = vld [vmem:[#allocation7 + $0xc] sm:$0xf]
    %v209 = vld [vmem:[%s5] sm:$0x1]
    %v211 = vlaneseq
    %v212 = vshrl.u32 %v211, 7
    %v213 = vsub.s32 0, %v212
    %v214 = vrot.slane %v209, %v213
    %v220 = vunpack.c.l.b16 %v205
    %v221 = vunpack.c.l.b16 %v206
    %v222 = vunpack.c.l.b16 %v207
    %v223 = vunpack.c.l.b16 %v208
    %v224 = vpack.c.b16 %v221, %v220
    %v225 = vpack.c.b16 %v223, %v222
    %228 = vmatprep.subr.bf16.mxu0 0
    %229 = vmatpush1.bf16.msra.mxu0 0
    %230 = vmatprep.subr.bf16.mxu0 0
    %231 = vmatpush1.bf16.msra.mxu0 0
    %232 = vmatprep.subr.bf16.mxu0 0
    %233 = vmatpush1.bf16.msra.mxu0 0
    %234 = vmatprep.subr.bf16.mxu0 0
    %235 = vmatpush1.bf16.msra.mxu0 0
    %236 = vmatprep.subr.bf16.mxu0 0
    %237 = vmatpush1.bf16.msra.mxu0 0
    %238 = vmatprep.subr.bf16.mxu0 0
    %239 = vmatpush1.bf16.msra.mxu0 0
    %240 = vmatprep.subr.bf16.mxu0 0
    %241 = vmatpush1.bf16.msra.mxu0 %v225
    %242 = vmatprep.subr.bf16.mxu0 0
    %243 = vmatpush1.bf16.msra.mxu0 %v224
    %244 = vmatprep.subr.bf16.mxu0 0
    %245 = vmatpush2.bf16.msra.mxu0 0
    %246 = vmatprep.subr.bf16.mxu0 0
    %247 = vmatpush2.bf16.msra.mxu0 0
    %248 = vmatprep.subr.bf16.mxu0 0
    %249 = vmatpush2.bf16.msra.mxu0 0
    %250 = vmatprep.subr.bf16.mxu0 0
    %251 = vmatpush2.bf16.msra.mxu0 0
    %252 = vmatprep.subr.bf16.mxu0 0
    %253 = vmatpush2.bf16.msra.mxu0 0
    %254 = vmatprep.subr.bf16.mxu0 0
    %255 = vmatpush2.bf16.msra.mxu0 0
    %256 = vmatprep.subr.bf16.mxu0 0
    %257 = vmatpush2.bf16.msra.mxu0 0
    %258 = vmatprep.subr.bf16.mxu0 0
    %259 = vmatpush2.bf16.msra.mxu0 0
    %260 = vmatprep.mubr.bf16.mxu0 0
    %261 = vmatmul.mubr.bf16.gmra.mxu0 %v162
    %v262 = vpop.f32.mrf.mxu0
    %v263 = vadd.f32 %v214, %v262
    %v264 = vpop.f32.mrf.mxu0
    %v265 = vpop.f32.mrf.mxu0
    %v266 = vpop.f32.mrf.mxu0
    %267 = vdwg.mxu0
    %v268 = vld [vmem:[#allocation8] sm:$0xf]
    %v269 = vld [vmem:[#allocation8 + $0x4] sm:$0xf]
    %v270 = vld [vmem:[#allocation8 + $0x8] sm:$0xf]
    %v271 = vld [vmem:[#allocation8 + $0xc] sm:$0xf]
    %v272 = vld [vmem:[%s6] sm:$0x1]
    %v274 = vlaneseq
    %v275 = vshrl.u32 %v274, 7
    %v276 = vsub.s32 0, %v275
    %v277 = vrot.slane %v272, %v276
    %v283 = vunpack.c.l.b16 %v268
    %v284 = vunpack.c.l.b16 %v269
    %v285 = vunpack.c.l.b16 %v270
    %v286 = vunpack.c.l.b16 %v271
    %v287 = vpack.c.b16 %v284, %v283
    %v288 = vpack.c.b16 %v286, %v285
    %291 = vmatprep.subr.bf16.mxu0 0
    %292 = vmatpush1.bf16.msra.mxu0 0
    %293 = vmatprep.subr.bf16.mxu0 0
    %294 = vmatpush1.bf16.msra.mxu0 0
    %295 = vmatprep.subr.bf16.mxu0 0
    %296 = vmatpush1.bf16.msra.mxu0 0
    %297 = vmatprep.subr.bf16.mxu0 0
    %298 = vmatpush1.bf16.msra.mxu0 0
    %299 = vmatprep.subr.bf16.mxu0 0
    %300 = vmatpush1.bf16.msra.mxu0 0
    %301 = vmatprep.subr.bf16.mxu0 0
    %302 = vmatpush1.bf16.msra.mxu0 0
    %303 = vmatprep.subr.bf16.mxu0 0
    %304 = vmatpush1.bf16.msra.mxu0 %v288
    %305 = vmatprep.subr.bf16.mxu0 0
    %306 = vmatpush1.bf16.msra.mxu0 %v287
    %307 = vmatprep.subr.bf16.mxu0 0
    %308 = vmatpush2.bf16.msra.mxu0 0
    %309 = vmatprep.subr.bf16.mxu0 0
    %310 = vmatpush2.bf16.msra.mxu0 0
    %311 = vmatprep.subr.bf16.mxu0 0
    %312 = vmatpush2.bf16.msra.mxu0 0
    %313 = vmatprep.subr.bf16.mxu0 0
    %314 = vmatpush2.bf16.msra.mxu0 0
    %315 = vmatprep.subr.bf16.mxu0 0
    %316 = vmatpush2.bf16.msra.mxu0 0
    %317 = vmatprep.subr.bf16.mxu0 0
    %318 = vmatpush2.bf16.msra.mxu0 0
    %319 = vmatprep.subr.bf16.mxu0 0
    %320 = vmatpush2.bf16.msra.mxu0 0
    %321 = vmatprep.subr.bf16.mxu0 0
    %322 = vmatpush2.bf16.msra.mxu0 0
    %323 = vmatprep.mubr.bf16.mxu0 0
    %324 = vmatmul.mubr.bf16.gmra.mxu0 %v162
    %v325 = vpop.f32.mrf.mxu0
    %v326 = vadd.f32 %v277, %v325
    %v327 = vpop.f32.mrf.mxu0
    %v328 = vpop.f32.mrf.mxu0
    %v329 = vpop.f32.mrf.mxu0
    %330 = vdwg.mxu0
    %v331 = vpack.c.bf16 %v204, %v204
    %333 = vrot.lane.b32.xlu0 %v331, 124
    %v334 = vpop.permute.xlu0 %333
    %335 = vrot.lane.b32.xlu0 %v331, 120
    %v336 = vpop.permute.xlu0 %335
    %337 = vrot.lane.b32.xlu0 %v331, 116
    %v338 = vpop.permute.xlu0 %337
    %339 = vrot.lane.b32.xlu0 %v331, 112
    %v340 = vpop.permute.xlu0 %339
    %341 = vrot.lane.b32.xlu0 %v331, 108
    %v342 = vpop.permute.xlu0 %341
    %343 = vrot.lane.b32.xlu0 %v331, 104
    %v344 = vpop.permute.xlu0 %343
    %345 = vrot.lane.b32.xlu0 %v331, 100
    %v346 = vpop.permute.xlu0 %345
    %v347 = vpack.c.bf16 %v263, %v263
    %349 = vrot.lane.b32.xlu0 %v347, 124
    %v350 = vpop.permute.xlu0 %349
    %351 = vrot.lane.b32.xlu0 %v347, 120
    %v352 = vpop.permute.xlu0 %351
    %353 = vrot.lane.b32.xlu0 %v347, 116
    %v354 = vpop.permute.xlu0 %353
    %355 = vrot.lane.b32.xlu0 %v347, 112
    %v356 = vpop.permute.xlu0 %355
    %357 = vrot.lane.b32.xlu0 %v347, 108
    %v358 = vpop.permute.xlu0 %357
    %359 = vrot.lane.b32.xlu0 %v347, 104
    %v360 = vpop.permute.xlu0 %359
    %361 = vrot.lane.b32.xlu0 %v347, 100
    %v362 = vpop.permute.xlu0 %361
    %v363 = vpack.c.bf16 %v326, %v326
    %365 = vrot.lane.b32.xlu0 %v363, 124
    %v366 = vpop.permute.xlu0 %365
    %367 = vrot.lane.b32.xlu0 %v363, 120
    %v368 = vpop.permute.xlu0 %367
    %369 = vrot.lane.b32.xlu0 %v363, 116
    %v370 = vpop.permute.xlu0 %369
    %371 = vrot.lane.b32.xlu0 %v363, 112
    %v372 = vpop.permute.xlu0 %371
    %373 = vrot.lane.b32.xlu0 %v363, 108
    %v374 = vpop.permute.xlu0 %373
    %375 = vrot.lane.b32.xlu0 %v363, 104
    %v376 = vpop.permute.xlu0 %375
    %377 = vrot.lane.b32.xlu0 %v363, 100
    %v378 = vpop.permute.xlu0 %377
    %vm379 = vcmask 31744
    %v381 = vsel %vm379, %v331, 0
    %v384 = vsel %vm379, %v347, 0
    %386 = vmatprep.subr.bf16.mxu0 0
    %387 = vmatpush1.bf16.xpose.msra.mxu0 0
    %388 = vmatprep.subr.bf16.mxu0 0
    %389 = vmatpush1.bf16.xpose.msra.mxu0 0
    %390 = vmatprep.subr.bf16.mxu0 0
    %391 = vmatpush1.bf16.xpose.msra.mxu0 0
    %392 = vmatprep.subr.bf16.mxu0 0
    %393 = vmatpush1.bf16.xpose.msra.mxu0 0
    %394 = vmatprep.subr.bf16.mxu0 0
    %395 = vmatpush1.bf16.xpose.msra.mxu0 0
    %396 = vmatprep.subr.bf16.mxu0 0
    %397 = vmatpush1.bf16.xpose.msra.mxu0 0
    %398 = vmatprep.subr.bf16.mxu0 0
    %399 = vmatpush1.bf16.xpose.msra.mxu0 0
    %400 = vmatprep.subr.bf16.mxu0 0
    %401 = vmatpush1.bf16.xpose.msra.mxu0 %v384
    %402 = vmatprep.subr.bf16.mxu0 0
    %403 = vmatpush2.bf16.xpose.msra.mxu0 0
    %404 = vmatprep.subr.bf16.mxu0 0
    %405 = vmatpush2.bf16.xpose.msra.mxu0 0
    %406 = vmatprep.subr.bf16.mxu0 0
    %407 = vmatpush2.bf16.xpose.msra.mxu0 0
    %408 = vmatprep.subr.bf16.mxu0 0
    %409 = vmatpush2.bf16.xpose.msra.mxu0 0
    %410 = vmatprep.subr.bf16.mxu0 0
    %411 = vmatpush2.bf16.xpose.msra.mxu0 0
    %412 = vmatprep.subr.bf16.mxu0 0
    %413 = vmatpush2.bf16.xpose.msra.mxu0 0
    %414 = vmatprep.subr.bf16.mxu0 0
    %415 = vmatpush2.bf16.xpose.msra.mxu0 0
    %416 = vmatprep.subr.bf16.mxu0 0
    %417 = vmatpush2.bf16.xpose.msra.mxu0 0
    %418 = vmatprep.mubr.bf16.mxu0 0
    %419 = vmatmul.mubr.bf16.gmra.mxu0 %v381
    %v420 = vpop.f32.mrf.mxu0
    %v421 = vadd.f32 0.0, %v420
    %v422 = vpop.f32.mrf.mxu0
    %v423 = vpop.f32.mrf.mxu0
    %v424 = vpop.f32.mrf.mxu0
    %425 = vdwg.mxu0
    %v427 = vsel %vm379, %v334, 0
    %v430 = vsel %vm379, %v350, 0
    %432 = vmatprep.subr.bf16.mxu0 0
    %433 = vmatpush1.bf16.xpose.msra.mxu0 0
    %434 = vmatprep.subr.bf16.mxu0 0
    %435 = vmatpush1.bf16.xpose.msra.mxu0 0
    %436 = vmatprep.subr.bf16.mxu0 0
    %437 = vmatpush1.bf16.xpose.msra.mxu0 0
    %438 = vmatprep.subr.bf16.mxu0 0
    %439 = vmatpush1.bf16.xpose.msra.mxu0 0
    %440 = vmatprep.subr.bf16.mxu0 0
    %441 = vmatpush1.bf16.xpose.msra.mxu0 0
    %442 = vmatprep.subr.bf16.mxu0 0
    %443 = vmatpush1.bf16.xpose.msra.mxu0 0
    %444 = vmatprep.subr.bf16.mxu0 0
    %445 = vmatpush1.bf16.xpose.msra.mxu0 0
    %446 = vmatprep.subr.bf16.mxu0 0
    %447 = vmatpush1.bf16.xpose.msra.mxu0 %v430
    %448 = vmatprep.subr.bf16.mxu0 0
    %449 = vmatpush2.bf16.xpose.msra.mxu0 0
    %450 = vmatprep.subr.bf16.mxu0 0
    %451 = vmatpush2.bf16.xpose.msra.mxu0 0
    %452 = vmatprep.subr.bf16.mxu0 0
    %453 = vmatpush2.bf16.xpose.msra.mxu0 0
    %454 = vmatprep.subr.bf16.mxu0 0
    %455 = vmatpush2.bf16.xpose.msra.mxu0 0
    %456 = vmatprep.subr.bf16.mxu0 0
    %457 = vmatpush2.bf16.xpose.msra.mxu0 0
    %458 = vmatprep.subr.bf16.mxu0 0
    %459 = vmatpush2.bf16.xpose.msra.mxu0 0
    %460 = vmatprep.subr.bf16.mxu0 0
    %461 = vmatpush2.bf16.xpose.msra.mxu0 0
    %462 = vmatprep.subr.bf16.mxu0 0
    %463 = vmatpush2.bf16.xpose.msra.mxu0 0
    %464 = vmatprep.mubr.bf16.mxu0 0
    %465 = vmatmul.mubr.bf16.gmra.mxu0 %v427
    %v466 = vpop.f32.mrf.mxu0
    %v467 = vadd.f32 0.0, %v466
    %v468 = vpop.f32.mrf.mxu0
    %v469 = vpop.f32.mrf.mxu0
    %v470 = vpop.f32.mrf.mxu0
    %471 = vdwg.mxu0
    %v473 = vsel %vm379, %v336, 0
    %v476 = vsel %vm379, %v352, 0
    %478 = vmatprep.subr.bf16.mxu0 0
    %479 = vmatpush1.bf16.xpose.msra.mxu0 0
    %480 = vmatprep.subr.bf16.mxu0 0
    %481 = vmatpush1.bf16.xpose.msra.mxu0 0
    %482 = vmatprep.subr.bf16.mxu0 0
    %483 = vmatpush1.bf16.xpose.msra.mxu0 0
    %484 = vmatprep.subr.bf16.mxu0 0
    %485 = vmatpush1.bf16.xpose.msra.mxu0 0
    %486 = vmatprep.subr.bf16.mxu0 0
    %487 = vmatpush1.bf16.xpose.msra.mxu0 0
    %488 = vmatprep.subr.bf16.mxu0 0
    %489 = vmatpush1.bf16.xpose.msra.mxu0 0
    %490 = vmatprep.subr.bf16.mxu0 0
    %491 = vmatpush1.bf16.xpose.msra.mxu0 0
    %492 = vmatprep.subr.bf16.mxu0 0
    %493 = vmatpush1.bf16.xpose.msra.mxu0 %v476
    %494 = vmatprep.subr.bf16.mxu0 0
    %495 = vmatpush2.bf16.xpose.msra.mxu0 0
    %496 = vmatprep.subr.bf16.mxu0 0
    %497 = vmatpush2.bf16.xpose.msra.mxu0 0
    %498 = vmatprep.subr.bf16.mxu0 0
    %499 = vmatpush2.bf16.xpose.msra.mxu0 0
    %500 = vmatprep.subr.bf16.mxu0 0
    %501 = vmatpush2.bf16.xpose.msra.mxu0 0
    %502 = vmatprep.subr.bf16.mxu0 0
    %503 = vmatpush2.bf16.xpose.msra.mxu0 0
    %504 = vmatprep.subr.bf16.mxu0 0
    %505 = vmatpush2.bf16.xpose.msra.mxu0 0
    %506 = vmatprep.subr.bf16.mxu0 0
    %507 = vmatpush2.bf16.xpose.msra.mxu0 0
    %508 = vmatprep.subr.bf16.mxu0 0
    %509 = vmatpush2.bf16.xpose.msra.mxu0 0
    %510 = vmatprep.mubr.bf16.mxu0 0
    %511 = vmatmul.mubr.bf16.gmra.mxu0 %v473
    %v512 = vpop.f32.mrf.mxu0
    %v513 = vadd.f32 0.0, %v512
    %v514 = vpop.f32.mrf.mxu0
    %v515 = vpop.f32.mrf.mxu0
    %v516 = vpop.f32.mrf.mxu0
    %517 = vdwg.mxu0
    %v519 = vsel %vm379, %v338, 0
    %v522 = vsel %vm379, %v354, 0
    %524 = vmatprep.subr.bf16.mxu0 0
    %525 = vmatpush1.bf16.xpose.msra.mxu0 0
    %526 = vmatprep.subr.bf16.mxu0 0
    %527 = vmatpush1.bf16.xpose.msra.mxu0 0
    %528 = vmatprep.subr.bf16.mxu0 0
    %529 = vmatpush1.bf16.xpose.msra.mxu0 0
    %530 = vmatprep.subr.bf16.mxu0 0
    %531 = vmatpush1.bf16.xpose.msra.mxu0 0
    %532 = vmatprep.subr.bf16.mxu0 0
    %533 = vmatpush1.bf16.xpose.msra.mxu0 0
    %534 = vmatprep.subr.bf16.mxu0 0
    %535 = vmatpush1.bf16.xpose.msra.mxu0 0
    %536 = vmatprep.subr.bf16.mxu0 0
    %537 = vmatpush1.bf16.xpose.msra.mxu0 0
    %538 = vmatprep.subr.bf16.mxu0 0
    %539 = vmatpush1.bf16.xpose.msra.mxu0 %v522
    %540 = vmatprep.subr.bf16.mxu0 0
    %541 = vmatpush2.bf16.xpose.msra.mxu0 0
    %542 = vmatprep.subr.bf16.mxu0 0
    %543 = vmatpush2.bf16.xpose.msra.mxu0 0
    %544 = vmatprep.subr.bf16.mxu0 0
    %545 = vmatpush2.bf16.xpose.msra.mxu0 0
    %546 = vmatprep.subr.bf16.mxu0 0
    %547 = vmatpush2.bf16.xpose.msra.mxu0 0
    %548 = vmatprep.subr.bf16.mxu0 0
    %549 = vmatpush2.bf16.xpose.msra.mxu0 0
    %550 = vmatprep.subr.bf16.mxu0 0
    %551 = vmatpush2.bf16.xpose.msra.mxu0 0
    %552 = vmatprep.subr.bf16.mxu0 0
    %553 = vmatpush2.bf16.xpose.msra.mxu0 0
    %554 = vmatprep.subr.bf16.mxu0 0
    %555 = vmatpush2.bf16.xpose.msra.mxu0 0
    %556 = vmatprep.mubr.bf16.mxu0 0
    %557 = vmatmul.mubr.bf16.gmra.mxu0 %v519
    %v558 = vpop.f32.mrf.mxu0
    %v559 = vadd.f32 0.0, %v558
    %v560 = vpop.f32.mrf.mxu0
    %v561 = vpop.f32.mrf.mxu0
    %v562 = vpop.f32.mrf.mxu0
    %563 = vdwg.mxu0
    %v565 = vsel %vm379, %v340, 0
    %v568 = vsel %vm379, %v356, 0
    %570 = vmatprep.subr.bf16.mxu0 0
    %571 = vmatpush1.bf16.xpose.msra.mxu0 0
    %572 = vmatprep.subr.bf16.mxu0 0
    %573 = vmatpush1.bf16.xpose.msra.mxu0 0
    %574 = vmatprep.subr.bf16.mxu0 0
    %575 = vmatpush1.bf16.xpose.msra.mxu0 0
    %576 = vmatprep.subr.bf16.mxu0 0
    %577 = vmatpush1.bf16.xpose.msra.mxu0 0
    %578 = vmatprep.subr.bf16.mxu0 0
    %579 = vmatpush1.bf16.xpose.msra.mxu0 0
    %580 = vmatprep.subr.bf16.mxu0 0
    %581 = vmatpush1.bf16.xpose.msra.mxu0 0
    %582 = vmatprep.subr.bf16.mxu0 0
    %583 = vmatpush1.bf16.xpose.msra.mxu0 0
    %584 = vmatprep.subr.bf16.mxu0 0
    %585 = vmatpush1.bf16.xpose.msra.mxu0 %v568
    %586 = vmatprep.subr.bf16.mxu0 0
    %587 = vmatpush2.bf16.xpose.msra.mxu0 0
    %588 = vmatprep.subr.bf16.mxu0 0
    %589 = vmatpush2.bf16.xpose.msra.mxu0 0
    %590 = vmatprep.subr.bf16.mxu0 0
    %591 = vmatpush2.bf16.xpose.msra.mxu0 0
    %592 = vmatprep.subr.bf16.mxu0 0
    %593 = vmatpush2.bf16.xpose.msra.mxu0 0
    %594 = vmatprep.subr.bf16.mxu0 0
    %595 = vmatpush2.bf16.xpose.msra.mxu0 0
    %596 = vmatprep.subr.bf16.mxu0 0
    %597 = vmatpush2.bf16.xpose.msra.mxu0 0
    %598 = vmatprep.subr.bf16.mxu0 0
    %599 = vmatpush2.bf16.xpose.msra.mxu0 0
    %600 = vmatprep.subr.bf16.mxu0 0
    %601 = vmatpush2.bf16.xpose.msra.mxu0 0
    %602 = vmatprep.mubr.bf16.mxu0 0
    %603 = vmatmul.mubr.bf16.gmra.mxu0 %v565
    %v604 = vpop.f32.mrf.mxu0
    %v605 = vadd.f32 0.0, %v604
    %v606 = vpop.f32.mrf.mxu0
    %v607 = vpop.f32.mrf.mxu0
    %v608 = vpop.f32.mrf.mxu0
    %609 = vdwg.mxu0
    %v611 = vsel %vm379, %v342, 0
    %v614 = vsel %vm379, %v358, 0
    %616 = vmatprep.subr.bf16.mxu0 0
    %617 = vmatpush1.bf16.xpose.msra.mxu0 0
    %618 = vmatprep.subr.bf16.mxu0 0
    %619 = vmatpush1.bf16.xpose.msra.mxu0 0
    %620 = vmatprep.subr.bf16.mxu0 0
    %621 = vmatpush1.bf16.xpose.msra.mxu0 0
    %622 = vmatprep.subr.bf16.mxu0 0
    %623 = vmatpush1.bf16.xpose.msra.mxu0 0
    %624 = vmatprep.subr.bf16.mxu0 0
    %625 = vmatpush1.bf16.xpose.msra.mxu0 0
    %626 = vmatprep.subr.bf16.mxu0 0
    %627 = vmatpush1.bf16.xpose.msra.mxu0 0
    %628 = vmatprep.subr.bf16.mxu0 0
    %629 = vmatpush1.bf16.xpose.msra.mxu0 0
    %630 = vmatprep.subr.bf16.mxu0 0
    %631 = vmatpush1.bf16.xpose.msra.mxu0 %v614
    %632 = vmatprep.subr.bf16.mxu0 0
    %633 = vmatpush2.bf16.xpose.msra.mxu0 0
    %634 = vmatprep.subr.bf16.mxu0 0
    %635 = vmatpush2.bf16.xpose.msra.mxu0 0
    %636 = vmatprep.subr.bf16.mxu0 0
    %637 = vmatpush2.bf16.xpose.msra.mxu0 0
    %638 = vmatprep.subr.bf16.mxu0 0
    %639 = vmatpush2.bf16.xpose.msra.mxu0 0
    %640 = vmatprep.subr.bf16.mxu0 0
    %641 = vmatpush2.bf16.xpose.msra.mxu0 0
    %642 = vmatprep.subr.bf16.mxu0 0
    %643 = vmatpush2.bf16.xpose.msra.mxu0 0
    %644 = vmatprep.subr.bf16.mxu0 0
    %645 = vmatpush2.bf16.xpose.msra.mxu0 0
    %646 = vmatprep.subr.bf16.mxu0 0
    %647 = vmatpush2.bf16.xpose.msra.mxu0 0
    %648 = vmatprep.mubr.bf16.mxu0 0
    %649 = vmatmul.mubr.bf16.gmra.mxu0 %v611
    %v650 = vpop.f32.mrf.mxu0
    %v651 = vadd.f32 0.0, %v650
    %v652 = vpop.f32.mrf.mxu0
    %v653 = vpop.f32.mrf.mxu0
    %v654 = vpop.f32.mrf.mxu0
    %655 = vdwg.mxu0
    %v657 = vsel %vm379, %v344, 0
    %v660 = vsel %vm379, %v360, 0
    %662 = vmatprep.subr.bf16.mxu0 0
    %663 = vmatpush1.bf16.xpose.msra.mxu0 0
    %664 = vmatprep.subr.bf16.mxu0 0
    %665 = vmatpush1.bf16.xpose.msra.mxu0 0
    %666 = vmatprep.subr.bf16.mxu0 0
    %667 = vmatpush1.bf16.xpose.msra.mxu0 0
    %668 = vmatprep.subr.bf16.mxu0 0
    %669 = vmatpush1.bf16.xpose.msra.mxu0 0
    %670 = vmatprep.subr.bf16.mxu0 0
    %671 = vmatpush1.bf16.xpose.msra.mxu0 0
    %672 = vmatprep.subr.bf16.mxu0 0
    %673 = vmatpush1.bf16.xpose.msra.mxu0 0
    %674 = vmatprep.subr.bf16.mxu0 0
    %675 = vmatpush1.bf16.xpose.msra.mxu0 0
    %676 = vmatprep.subr.bf16.mxu0 0
    %677 = vmatpush1.bf16.xpose.msra.mxu0 %v660
    %678 = vmatprep.subr.bf16.mxu0 0
    %679 = vmatpush2.bf16.xpose.msra.mxu0 0
    %680 = vmatprep.subr.bf16.mxu0 0
    %681 = vmatpush2.bf16.xpose.msra.mxu0 0
    %682 = vmatprep.subr.bf16.mxu0 0
    %683 = vmatpush2.bf16.xpose.msra.mxu0 0
    %684 = vmatprep.subr.bf16.mxu0 0
    %685 = vmatpush2.bf16.xpose.msra.mxu0 0
    %686 = vmatprep.subr.bf16.mxu0 0
    %687 = vmatpush2.bf16.xpose.msra.mxu0 0
    %688 = vmatprep.subr.bf16.mxu0 0
    %689 = vmatpush2.bf16.xpose.msra.mxu0 0
    %690 = vmatprep.subr.bf16.mxu0 0
    %691 = vmatpush2.bf16.xpose.msra.mxu0 0
    %692 = vmatprep.subr.bf16.mxu0 0
    %693 = vmatpush2.bf16.xpose.msra.mxu0 0
    %694 = vmatprep.mubr.bf16.mxu0 0
    %695 = vmatmul.mubr.bf16.gmra.mxu0 %v657
    %v696 = vpop.f32.mrf.mxu0
    %v697 = vadd.f32 0.0, %v696
    %v698 = vpop.f32.mrf.mxu0
    %v699 = vpop.f32.mrf.mxu0
    %v700 = vpop.f32.mrf.mxu0
    %701 = vdwg.mxu0
    %v703 = vsel %vm379, %v346, 0
    %v706 = vsel %vm379, %v362, 0
    %708 = vmatprep.subr.bf16.mxu0 0
    %709 = vmatpush1.bf16.xpose.msra.mxu0 0
    %710 = vmatprep.subr.bf16.mxu0 0
    %711 = vmatpush1.bf16.xpose.msra.mxu0 0
    %712 = vmatprep.subr.bf16.mxu0 0
    %713 = vmatpush1.bf16.xpose.msra.mxu0 0
    %714 = vmatprep.subr.bf16.mxu0 0
    %715 = vmatpush1.bf16.xpose.msra.mxu0 0
    %716 = vmatprep.subr.bf16.mxu0 0
    %717 = vmatpush1.bf16.xpose.msra.mxu0 0
    %718 = vmatprep.subr.bf16.mxu0 0
    %719 = vmatpush1.bf16.xpose.msra.mxu0 0
    %720 = vmatprep.subr.bf16.mxu0 0
    %721 = vmatpush1.bf16.xpose.msra.mxu0 0
    %722 = vmatprep.subr.bf16.mxu0 0
    %723 = vmatpush1.bf16.xpose.msra.mxu0 %v706
    %724 = vmatprep.subr.bf16.mxu0 0
    %725 = vmatpush2.bf16.xpose.msra.mxu0 0
    %726 = vmatprep.subr.bf16.mxu0 0
    %727 = vmatpush2.bf16.xpose.msra.mxu0 0
    %728 = vmatprep.subr.bf16.mxu0 0
    %729 = vmatpush2.bf16.xpose.msra.mxu0 0
    %730 = vmatprep.subr.bf16.mxu0 0
    %731 = vmatpush2.bf16.xpose.msra.mxu0 0
    %732 = vmatprep.subr.bf16.mxu0 0
    %733 = vmatpush2.bf16.xpose.msra.mxu0 0
    %734 = vmatprep.subr.bf16.mxu0 0
    %735 = vmatpush2.bf16.xpose.msra.mxu0 0
    %736 = vmatprep.subr.bf16.mxu0 0
    %737 = vmatpush2.bf16.xpose.msra.mxu0 0
    %738 = vmatprep.subr.bf16.mxu0 0
    %739 = vmatpush2.bf16.xpose.msra.mxu0 0
    %740 = vmatprep.mubr.bf16.mxu0 0
    %741 = vmatmul.mubr.bf16.gmra.mxu0 %v703
    %v742 = vpop.f32.mrf.mxu0
    %v743 = vadd.f32 0.0, %v742
    %v744 = vpop.f32.mrf.mxu0
    %v745 = vpop.f32.mrf.mxu0
    %v746 = vpop.f32.mrf.mxu0
    %747 = vdwg.mxu0
    %vm748 = vcmask 64512
    %v749 = vsel %vm748, %v421, -inf
    %750 = vmax.xlane.f32.xlu0 %v749
    %v751 = vpop.xlane.xlu0 %750
    %v752 = vsel %vm748, %v467, -inf
    %753 = vmax.xlane.f32.xlu0 %v752
    %v754 = vpop.xlane.xlu0 %753
    %v755 = vsel %vm748, %v513, -inf
    %756 = vmax.xlane.f32.xlu0 %v755
    %v757 = vpop.xlane.xlu0 %756
    %v758 = vsel %vm748, %v559, -inf
    %759 = vmax.xlane.f32.xlu0 %v758
    %v760 = vpop.xlane.xlu0 %759
    %v761 = vsel %vm748, %v605, -inf
    %762 = vmax.xlane.f32.xlu0 %v761
    %v763 = vpop.xlane.xlu0 %762
    %v764 = vsel %vm748, %v651, -inf
    %765 = vmax.xlane.f32.xlu0 %v764
    %v766 = vpop.xlane.xlu0 %765
    %v767 = vsel %vm748, %v697, -inf
    %768 = vmax.xlane.f32.xlu0 %v767
    %v769 = vpop.xlane.xlu0 %768
    %v770 = vsel %vm748, %v743, -inf
    %771 = vmax.xlane.f32.xlu0 %v770
    %v772 = vpop.xlane.xlu0 %771
    %v773 = vsub.f32 %v421, %v751
    %v774 = vsub.f32 %v467, %v754
    %v775 = vsub.f32 %v513, %v757
    %v776 = vsub.f32 %v559, %v760
    %v777 = vsub.f32 %v605, %v763
    %v778 = vsub.f32 %v651, %v766
    %v779 = vsub.f32 %v697, %v769
    %v780 = vsub.f32 %v743, %v772
    %v781 = vmul.f32 %v773, 1.442695
    %v782 = vpow.pop %v781
    %v783 = vmul.f32 %v774, 1.442695
    %v784 = vpow.pop %v783
    %v785 = vmul.f32 %v775, 1.442695
    %v786 = vpow.pop %v785
    %v787 = vmul.f32 %v776, 1.442695
    %v788 = vpow.pop %v787
    %v789 = vmul.f32 %v777, 1.442695
    %v790 = vpow.pop %v789
    %v791 = vmul.f32 %v778, 1.442695
    %v792 = vpow.pop %v791
    %v793 = vmul.f32 %v779, 1.442695
    %v794 = vpow.pop %v793
    %v795 = vmul.f32 %v780, 1.442695
    %v796 = vpow.pop %v795
    %v797 = vsel %vm748, %v782, 0.0
    %798 = vadd.xlane.f32.xlu0 %v797
    %v799 = vpop.xlane.xlu0 %798
    %v800 = vsel %vm748, %v784, 0.0
    %801 = vadd.xlane.f32.xlu0 %v800
    %v802 = vpop.xlane.xlu0 %801
    %v803 = vsel %vm748, %v786, 0.0
    %804 = vadd.xlane.f32.xlu0 %v803
    %v805 = vpop.xlane.xlu0 %804
    %v806 = vsel %vm748, %v788, 0.0
    %807 = vadd.xlane.f32.xlu0 %v806
    %v808 = vpop.xlane.xlu0 %807
    %v809 = vsel %vm748, %v790, 0.0
    %810 = vadd.xlane.f32.xlu0 %v809
    %v811 = vpop.xlane.xlu0 %810
    %v812 = vsel %vm748, %v792, 0.0
    %813 = vadd.xlane.f32.xlu0 %v812
    %v814 = vpop.xlane.xlu0 %813
    %v815 = vsel %vm748, %v794, 0.0
    %816 = vadd.xlane.f32.xlu0 %v815
    %v817 = vpop.xlane.xlu0 %816
    %v818 = vsel %vm748, %v796, 0.0
    %819 = vadd.xlane.f32.xlu0 %v818
    %v820 = vpop.xlane.xlu0 %819
    %v821 = vrcp.pop %v799
    %v822 = vrcp.pop %v802
    %v823 = vrcp.pop %v805
    %v824 = vrcp.pop %v808
    %v825 = vrcp.pop %v811
    %v826 = vrcp.pop %v814
    %v827 = vrcp.pop %v817
    %v828 = vrcp.pop %v820
    %v829 = vmul.f32 %v782, %v821
    %v830 = vmul.f32 %v784, %v822
    %v831 = vmul.f32 %v786, %v823
    %v832 = vmul.f32 %v788, %v824
    %v833 = vmul.f32 %v790, %v825
    %v834 = vmul.f32 %v792, %v826
    %v835 = vmul.f32 %v794, %v827
    %v836 = vmul.f32 %v796, %v828
    %v837 = vpack.c.bf16 %v829, %v829
    %v838 = vpack.c.bf16 %v830, %v830
    %v839 = vpack.c.bf16 %v831, %v831
    %v840 = vpack.c.bf16 %v832, %v832
    %v841 = vpack.c.bf16 %v833, %v833
    %v842 = vpack.c.bf16 %v834, %v834
    %v843 = vpack.c.bf16 %v835, %v835
    %v844 = vpack.c.bf16 %v836, %v836
    %v846 = vsel %vm748, %v837, 0
    %vm848 = vcmask 1043456
    %v850 = vsel %vm848, %v363, 0
    %852 = vmatprep.subr.bf16.mxu0 0
    %853 = vmatpush1.bf16.msra.mxu0 0
    %854 = vmatprep.subr.bf16.mxu0 0
    %855 = vmatpush1.bf16.msra.mxu0 0
    %856 = vmatprep.subr.bf16.mxu0 0
    %857 = vmatpush1.bf16.msra.mxu0 0
    %858 = vmatprep.subr.bf16.mxu0 0
    %859 = vmatpush1.bf16.msra.mxu0 0
    %860 = vmatprep.subr.bf16.mxu0 0
    %861 = vmatpush1.bf16.msra.mxu0 0
    %862 = vmatprep.subr.bf16.mxu0 0
    %863 = vmatpush1.bf16.msra.mxu0 0
    %864 = vmatprep.subr.bf16.mxu0 0
    %865 = vmatpush1.bf16.msra.mxu0 0
    %866 = vmatprep.subr.bf16.mxu0 0
    %867 = vmatpush1.bf16.msra.mxu0 %v850
    %868 = vmatprep.subr.bf16.mxu0 0
    %869 = vmatpush2.bf16.msra.mxu0 0
    %870 = vmatprep.subr.bf16.mxu0 0
    %871 = vmatpush2.bf16.msra.mxu0 0
    %872 = vmatprep.subr.bf16.mxu0 0
    %873 = vmatpush2.bf16.msra.mxu0 0
    %874 = vmatprep.subr.bf16.mxu0 0
    %875 = vmatpush2.bf16.msra.mxu0 0
    %876 = vmatprep.subr.bf16.mxu0 0
    %877 = vmatpush2.bf16.msra.mxu0 0
    %878 = vmatprep.subr.bf16.mxu0 0
    %879 = vmatpush2.bf16.msra.mxu0 0
    %880 = vmatprep.subr.bf16.mxu0 0
    %881 = vmatpush2.bf16.msra.mxu0 0
    %882 = vmatprep.subr.bf16.mxu0 0
    %883 = vmatpush2.bf16.msra.mxu0 0
    %884 = vmatprep.mubr.bf16.mxu0 0
    %885 = vmatmul.mubr.bf16.gmra.mxu0 %v846
    %v886 = vpop.f32.mrf.mxu0
    %v887 = vadd.f32 0.0, %v886
    %v888 = vpop.f32.mrf.mxu0
    %v889 = vpop.f32.mrf.mxu0
    %v890 = vpop.f32.mrf.mxu0
    %891 = vdwg.mxu0
    %v893 = vsel %vm748, %v838, 0
    %v896 = vsel %vm848, %v366, 0
    %898 = vmatprep.subr.bf16.mxu0 0
    %899 = vmatpush1.bf16.msra.mxu0 0
    %900 = vmatprep.subr.bf16.mxu0 0
    %901 = vmatpush1.bf16.msra.mxu0 0
    %902 = vmatprep.subr.bf16.mxu0 0
    %903 = vmatpush1.bf16.msra.mxu0 0
    %904 = vmatprep.subr.bf16.mxu0 0
    %905 = vmatpush1.bf16.msra.mxu0 0
    %906 = vmatprep.subr.bf16.mxu0 0
    %907 = vmatpush1.bf16.msra.mxu0 0
    %908 = vmatprep.subr.bf16.mxu0 0
    %909 = vmatpush1.bf16.msra.mxu0 0
    %910 = vmatprep.subr.bf16.mxu0 0
    %911 = vmatpush1.bf16.msra.mxu0 0
    %912 = vmatprep.subr.bf16.mxu0 0
    %913 = vmatpush1.bf16.msra.mxu0 %v896
    %914 = vmatprep.subr.bf16.mxu0 0
    %915 = vmatpush2.bf16.msra.mxu0 0
    %916 = vmatprep.subr.bf16.mxu0 0
    %917 = vmatpush2.bf16.msra.mxu0 0
    %918 = vmatprep.subr.bf16.mxu0 0
    %919 = vmatpush2.bf16.msra.mxu0 0
    %920 = vmatprep.subr.bf16.mxu0 0
    %921 = vmatpush2.bf16.msra.mxu0 0
    %922 = vmatprep.subr.bf16.mxu0 0
    %923 = vmatpush2.bf16.msra.mxu0 0
    %924 = vmatprep.subr.bf16.mxu0 0
    %925 = vmatpush2.bf16.msra.mxu0 0
    %926 = vmatprep.subr.bf16.mxu0 0
    %927 = vmatpush2.bf16.msra.mxu0 0
    %928 = vmatprep.subr.bf16.mxu0 0
    %929 = vmatpush2.bf16.msra.mxu0 0
    %930 = vmatprep.mubr.bf16.mxu0 0
    %931 = vmatmul.mubr.bf16.gmra.mxu0 %v893
    %v932 = vpop.f32.mrf.mxu0
    %v933 = vadd.f32 0.0, %v932
    %v934 = vpop.f32.mrf.mxu0
    %v935 = vpop.f32.mrf.mxu0
    %v936 = vpop.f32.mrf.mxu0
    %937 = vdwg.mxu0
    %v939 = vsel %vm748, %v839, 0
    %v942 = vsel %vm848, %v368, 0
    %944 = vmatprep.subr.bf16.mxu0 0
    %945 = vmatpush1.bf16.msra.mxu0 0
    %946 = vmatprep.subr.bf16.mxu0 0
    %947 = vmatpush1.bf16.msra.mxu0 0
    %948 = vmatprep.subr.bf16.mxu0 0
    %949 = vmatpush1.bf16.msra.mxu0 0
    %950 = vmatprep.subr.bf16.mxu0 0
    %951 = vmatpush1.bf16.msra.mxu0 0
    %952 = vmatprep.subr.bf16.mxu0 0
    %953 = vmatpush1.bf16.msra.mxu0 0
    %954 = vmatprep.subr.bf16.mxu0 0
    %955 = vmatpush1.bf16.msra.mxu0 0
    %956 = vmatprep.subr.bf16.mxu0 0
    %957 = vmatpush1.bf16.msra.mxu0 0
    %958 = vmatprep.subr.bf16.mxu0 0
    %959 = vmatpush1.bf16.msra.mxu0 %v942
    %960 = vmatprep.subr.bf16.mxu0 0
    %961 = vmatpush2.bf16.msra.mxu0 0
    %962 = vmatprep.subr.bf16.mxu0 0
    %963 = vmatpush2.bf16.msra.mxu0 0
    %964 = vmatprep.subr.bf16.mxu0 0
    %965 = vmatpush2.bf16.msra.mxu0 0
    %966 = vmatprep.subr.bf16.mxu0 0
    %967 = vmatpush2.bf16.msra.mxu0 0
    %968 = vmatprep.subr.bf16.mxu0 0
    %969 = vmatpush2.bf16.msra.mxu0 0
    %970 = vmatprep.subr.bf16.mxu0 0
    %971 = vmatpush2.bf16.msra.mxu0 0
    %972 = vmatprep.subr.bf16.mxu0 0
    %973 = vmatpush2.bf16.msra.mxu0 0
    %974 = vmatprep.subr.bf16.mxu0 0
    %975 = vmatpush2.bf16.msra.mxu0 0
    %976 = vmatprep.mubr.bf16.mxu0 0
    %977 = vmatmul.mubr.bf16.gmra.mxu0 %v939
    %v978 = vpop.f32.mrf.mxu0
    %v979 = vadd.f32 0.0, %v978
    %v980 = vpop.f32.mrf.mxu0
    %v981 = vpop.f32.mrf.mxu0
    %v982 = vpop.f32.mrf.mxu0
    %983 = vdwg.mxu0
    %v985 = vsel %vm748, %v840, 0
    %v988 = vsel %vm848, %v370, 0
    %990 = vmatprep.subr.bf16.mxu0 0
    %991 = vmatpush1.bf16.msra.mxu0 0
    %992 = vmatprep.subr.bf16.mxu0 0
    %993 = vmatpush1.bf16.msra.mxu0 0
    %994 = vmatprep.subr.bf16.mxu0 0
    %995 = vmatpush1.bf16.msra.mxu0 0
    %996 = vmatprep.subr.bf16.mxu0 0
    %997 = vmatpush1.bf16.msra.mxu0 0
    %998 = vmatprep.subr.bf16.mxu0 0
    %999 = vmatpush1.bf16.msra.mxu0 0
    %1000 = vmatprep.subr.bf16.mxu0 0
    %1001 = vmatpush1.bf16.msra.mxu0 0
    %1002 = vmatprep.subr.bf16.mxu0 0
    %1003 = vmatpush1.bf16.msra.mxu0 0
    %1004 = vmatprep.subr.bf16.mxu0 0
    %1005 = vmatpush1.bf16.msra.mxu0 %v988
    %1006 = vmatprep.subr.bf16.mxu0 0
    %1007 = vmatpush2.bf16.msra.mxu0 0
    %1008 = vmatprep.subr.bf16.mxu0 0
    %1009 = vmatpush2.bf16.msra.mxu0 0
    %1010 = vmatprep.subr.bf16.mxu0 0
    %1011 = vmatpush2.bf16.msra.mxu0 0
    %1012 = vmatprep.subr.bf16.mxu0 0
    %1013 = vmatpush2.bf16.msra.mxu0 0
    %1014 = vmatprep.subr.bf16.mxu0 0
    %1015 = vmatpush2.bf16.msra.mxu0 0
    %1016 = vmatprep.subr.bf16.mxu0 0
    %1017 = vmatpush2.bf16.msra.mxu0 0
    %1018 = vmatprep.subr.bf16.mxu0 0
    %1019 = vmatpush2.bf16.msra.mxu0 0
    %1020 = vmatprep.subr.bf16.mxu0 0
    %1021 = vmatpush2.bf16.msra.mxu0 0
    %1022 = vmatprep.mubr.bf16.mxu0 0
    %1023 = vmatmul.mubr.bf16.gmra.mxu0 %v985
    %v1024 = vpop.f32.mrf.mxu0
    %v1025 = vadd.f32 0.0, %v1024
    %v1026 = vpop.f32.mrf.mxu0
    %v1027 = vpop.f32.mrf.mxu0
    %v1028 = vpop.f32.mrf.mxu0
    %1029 = vdwg.mxu0
    %v1031 = vsel %vm748, %v841, 0
    %v1034 = vsel %vm848, %v372, 0
    %1036 = vmatprep.subr.bf16.mxu0 0
    %1037 = vmatpush1.bf16.msra.mxu0 0
    %1038 = vmatprep.subr.bf16.mxu0 0
    %1039 = vmatpush1.bf16.msra.mxu0 0
    %1040 = vmatprep.subr.bf16.mxu0 0
    %1041 = vmatpush1.bf16.msra.mxu0 0
    %1042 = vmatprep.subr.bf16.mxu0 0
    %1043 = vmatpush1.bf16.msra.mxu0 0
    %1044 = vmatprep.subr.bf16.mxu0 0
    %1045 = vmatpush1.bf16.msra.mxu0 0
    %1046 = vmatprep.subr.bf16.mxu0 0
    %1047 = vmatpush1.bf16.msra.mxu0 0
    %1048 = vmatprep.subr.bf16.mxu0 0
    %1049 = vmatpush1.bf16.msra.mxu0 0
    %1050 = vmatprep.subr.bf16.mxu0 0
    %1051 = vmatpush1.bf16.msra.mxu0 %v1034
    %1052 = vmatprep.subr.bf16.mxu0 0
    %1053 = vmatpush2.bf16.msra.mxu0 0
    %1054 = vmatprep.subr.bf16.mxu0 0
    %1055 = vmatpush2.bf16.msra.mxu0 0
    %1056 = vmatprep.subr.bf16.mxu0 0
    %1057 = vmatpush2.bf16.msra.mxu0 0
    %1058 = vmatprep.subr.bf16.mxu0 0
    %1059 = vmatpush2.bf16.msra.mxu0 0
    %1060 = vmatprep.subr.bf16.mxu0 0
    %1061 = vmatpush2.bf16.msra.mxu0 0
    %1062 = vmatprep.subr.bf16.mxu0 0
    %1063 = vmatpush2.bf16.msra.mxu0 0
    %1064 = vmatprep.subr.bf16.mxu0 0
    %1065 = vmatpush2.bf16.msra.mxu0 0
    %1066 = vmatprep.subr.bf16.mxu0 0
    %1067 = vmatpush2.bf16.msra.mxu0 0
    %1068 = vmatprep.mubr.bf16.mxu0 0
    %1069 = vmatmul.mubr.bf16.gmra.mxu0 %v1031
    %v1070 = vpop.f32.mrf.mxu0
    %v1071 = vadd.f32 0.0, %v1070
    %v1072 = vpop.f32.mrf.mxu0
    %v1073 = vpop.f32.mrf.mxu0
    %v1074 = vpop.f32.mrf.mxu0
    %1075 = vdwg.mxu0
    %v1077 = vsel %vm748, %v842, 0
    %v1080 = vsel %vm848, %v374, 0
    %1082 = vmatprep.subr.bf16.mxu0 0
    %1083 = vmatpush1.bf16.msra.mxu0 0
    %1084 = vmatprep.subr.bf16.mxu0 0
    %1085 = vmatpush1.bf16.msra.mxu0 0
    %1086 = vmatprep.subr.bf16.mxu0 0
    %1087 = vmatpush1.bf16.msra.mxu0 0
    %1088 = vmatprep.subr.bf16.mxu0 0
    %1089 = vmatpush1.bf16.msra.mxu0 0
    %1090 = vmatprep.subr.bf16.mxu0 0
    %1091 = vmatpush1.bf16.msra.mxu0 0
    %1092 = vmatprep.subr.bf16.mxu0 0
    %1093 = vmatpush1.bf16.msra.mxu0 0
    %1094 = vmatprep.subr.bf16.mxu0 0
    %1095 = vmatpush1.bf16.msra.mxu0 0
    %1096 = vmatprep.subr.bf16.mxu0 0
    %1097 = vmatpush1.bf16.msra.mxu0 %v1080
    %1098 = vmatprep.subr.bf16.mxu0 0
    %1099 = vmatpush2.bf16.msra.mxu0 0
    %1100 = vmatprep.subr.bf16.mxu0 0
    %1101 = vmatpush2.bf16.msra.mxu0 0
    %1102 = vmatprep.subr.bf16.mxu0 0
    %1103 = vmatpush2.bf16.msra.mxu0 0
    %1104 = vmatprep.subr.bf16.mxu0 0
    %1105 = vmatpush2.bf16.msra.mxu0 0
    %1106 = vmatprep.subr.bf16.mxu0 0
    %1107 = vmatpush2.bf16.msra.mxu0 0
    %1108 = vmatprep.subr.bf16.mxu0 0
    %1109 = vmatpush2.bf16.msra.mxu0 0
    %1110 = vmatprep.subr.bf16.mxu0 0
    %1111 = vmatpush2.bf16.msra.mxu0 0
    %1112 = vmatprep.subr.bf16.mxu0 0
    %1113 = vmatpush2.bf16.msra.mxu0 0
    %1114 = vmatprep.mubr.bf16.mxu0 0
    %1115 = vmatmul.mubr.bf16.gmra.mxu0 %v1077
    %v1116 = vpop.f32.mrf.mxu0
    %v1117 = vadd.f32 0.0, %v1116
    %v1118 = vpop.f32.mrf.mxu0
    %v1119 = vpop.f32.mrf.mxu0
    %v1120 = vpop.f32.mrf.mxu0
    %1121 = vdwg.mxu0
    %v1123 = vsel %vm748, %v843, 0
    %v1126 = vsel %vm848, %v376, 0
    %1128 = vmatprep.subr.bf16.mxu0 0
    %1129 = vmatpush1.bf16.msra.mxu0 0
    %1130 = vmatprep.subr.bf16.mxu0 0
    %1131 = vmatpush1.bf16.msra.mxu0 0
    %1132 = vmatprep.subr.bf16.mxu0 0
    %1133 = vmatpush1.bf16.msra.mxu0 0
    %1134 = vmatprep.subr.bf16.mxu0 0
    %1135 = vmatpush1.bf16.msra.mxu0 0
    %1136 = vmatprep.subr.bf16.mxu0 0
    %1137 = vmatpush1.bf16.msra.mxu0 0
    %1138 = vmatprep.subr.bf16.mxu0 0
    %1139 = vmatpush1.bf16.msra.mxu0 0
    %1140 = vmatprep.subr.bf16.mxu0 0
    %1141 = vmatpush1.bf16.msra.mxu0 0
    %1142 = vmatprep.subr.bf16.mxu0 0
    %1143 = vmatpush1.bf16.msra.mxu0 %v1126
    %1144 = vmatprep.subr.bf16.mxu0 0
    %1145 = vmatpush2.bf16.msra.mxu0 0
    %1146 = vmatprep.subr.bf16.mxu0 0
    %1147 = vmatpush2.bf16.msra.mxu0 0
    %1148 = vmatprep.subr.bf16.mxu0 0
    %1149 = vmatpush2.bf16.msra.mxu0 0
    %1150 = vmatprep.subr.bf16.mxu0 0
    %1151 = vmatpush2.bf16.msra.mxu0 0
    %1152 = vmatprep.subr.bf16.mxu0 0
    %1153 = vmatpush2.bf16.msra.mxu0 0
    %1154 = vmatprep.subr.bf16.mxu0 0
    %1155 = vmatpush2.bf16.msra.mxu0 0
    %1156 = vmatprep.subr.bf16.mxu0 0
    %1157 = vmatpush2.bf16.msra.mxu0 0
    %1158 = vmatprep.subr.bf16.mxu0 0
    %1159 = vmatpush2.bf16.msra.mxu0 0
    %1160 = vmatprep.mubr.bf16.mxu0 0
    %1161 = vmatmul.mubr.bf16.gmra.mxu0 %v1123
    %v1162 = vpop.f32.mrf.mxu0
    %v1163 = vadd.f32 0.0, %v1162
    %v1164 = vpop.f32.mrf.mxu0
    %v1165 = vpop.f32.mrf.mxu0
    %v1166 = vpop.f32.mrf.mxu0
    %1167 = vdwg.mxu0
    %v1169 = vsel %vm748, %v844, 0
    %v1172 = vsel %vm848, %v378, 0
    %1174 = vmatprep.subr.bf16.mxu0 0
    %1175 = vmatpush1.bf16.msra.mxu0 0
    %1176 = vmatprep.subr.bf16.mxu0 0
    %1177 = vmatpush1.bf16.msra.mxu0 0
    %1178 = vmatprep.subr.bf16.mxu0 0
    %1179 = vmatpush1.bf16.msra.mxu0 0
    %1180 = vmatprep.subr.bf16.mxu0 0
    %1181 = vmatpush1.bf16.msra.mxu0 0
    %1182 = vmatprep.subr.bf16.mxu0 0
    %1183 = vmatpush1.bf16.msra.mxu0 0
    %1184 = vmatprep.subr.bf16.mxu0 0
    %1185 = vmatpush1.bf16.msra.mxu0 0
    %1186 = vmatprep.subr.bf16.mxu0 0
    %1187 = vmatpush1.bf16.msra.mxu0 0
    %1188 = vmatprep.subr.bf16.mxu0 0
    %1189 = vmatpush1.bf16.msra.mxu0 %v1172
    %1190 = vmatprep.subr.bf16.mxu0 0
    %1191 = vmatpush2.bf16.msra.mxu0 0
    %1192 = vmatprep.subr.bf16.mxu0 0
    %1193 = vmatpush2.bf16.msra.mxu0 0
    %1194 = vmatprep.subr.bf16.mxu0 0
    %1195 = vmatpush2.bf16.msra.mxu0 0
    %1196 = vmatprep.subr.bf16.mxu0 0
    %1197 = vmatpush2.bf16.msra.mxu0 0
    %1198 = vmatprep.subr.bf16.mxu0 0
    %1199 = vmatpush2.bf16.msra.mxu0 0
    %1200 = vmatprep.subr.bf16.mxu0 0
    %1201 = vmatpush2.bf16.msra.mxu0 0
    %1202 = vmatprep.subr.bf16.mxu0 0
    %1203 = vmatpush2.bf16.msra.mxu0 0
    %1204 = vmatprep.subr.bf16.mxu0 0
    %1205 = vmatpush2.bf16.msra.mxu0 0
    %1206 = vmatprep.mubr.bf16.mxu0 0
    %1207 = vmatmul.mubr.bf16.gmra.mxu0 %v1169
    %v1208 = vpop.f32.mrf.mxu0
    %v1209 = vadd.f32 0.0, %v1208
    %v1210 = vpop.f32.mrf.mxu0
    %v1211 = vpop.f32.mrf.mxu0
    %v1212 = vpop.f32.mrf.mxu0
    %1213 = vdwg.mxu0
    %1215 = vrot.lane.b32.xlu0 %v933, 4
    %v1216 = vpop.permute.xlu0 %1215
    %1219 = vrot.lane.b32.xlu0 %v979, 8
    %v1220 = vpop.permute.xlu0 %1219
    %1223 = vrot.lane.b32.xlu0 %v1025, 12
    %v1224 = vpop.permute.xlu0 %1223
    %1227 = vrot.lane.b32.xlu0 %v1071, 16
    %v1228 = vpop.permute.xlu0 %1227
    %1231 = vrot.lane.b32.xlu0 %v1117, 20
    %v1232 = vpop.permute.xlu0 %1231
    %1235 = vrot.lane.b32.xlu0 %v1163, 24
    %v1236 = vpop.permute.xlu0 %1235
    %1239 = vrot.lane.b32.xlu0 %v1209, 28
    %v1240 = vpop.permute.xlu0 %1239
    %v1242 = vsel %vm379, %v887, %v1216
    %v1243 = vsel %vm748, %v1242, %v1220
    %vm1244 = vcmask 97280
    %v1245 = vsel %vm1244, %v1243, %v1224
    %vm1246 = vcmask 130048
    %v1247 = vsel %vm1246, %v1245, %v1228
    %vm1248 = vcmask 162816
    %v1249 = vsel %vm1248, %v1247, %v1232
    %vm1250 = vcmask 195584
    %v1251 = vsel %vm1250, %v1249, %v1236
    %vm1252 = vcmask 228352
    %v1253 = vsel %vm1252, %v1251, %v1240
    %v1254 = vpack.c.bf16 %v1253, %v1253
    %v1255 = vld [vmem:[#allocation10] sm:$0xf]
    %v1256 = vld [vmem:[#allocation10 + $0x4] sm:$0xf]
    %v1257 = vld [vmem:[#allocation10 + $0x8] sm:$0xf]
    %v1258 = vld [vmem:[#allocation10 + $0xc] sm:$0xf]
    %v1259 = vld [vmem:[%s8] sm:$0x1]
    %v1261 = vlaneseq
    %v1262 = vshrl.u32 %v1261, 7
    %v1263 = vsub.s32 0, %v1262
    %v1264 = vrot.slane %v1259, %v1263
    %v1270 = vunpack.c.l.b16 %v1255
    %v1271 = vunpack.c.l.b16 %v1256
    %v1272 = vunpack.c.l.b16 %v1257
    %v1273 = vunpack.c.l.b16 %v1258
    %v1274 = vpack.c.b16 %v1271, %v1270
    %v1275 = vpack.c.b16 %v1273, %v1272
    %v1279 = vsel %vm160, %v1254, 0
    %1281 = vmatprep.subr.bf16.mxu0 0
    %1282 = vmatpush1.bf16.msra.mxu0 0
    %1283 = vmatprep.subr.bf16.mxu0 0
    %1284 = vmatpush1.bf16.msra.mxu0 0
    %1285 = vmatprep.subr.bf16.mxu0 0
    %1286 = vmatpush1.bf16.msra.mxu0 0
    %1287 = vmatprep.subr.bf16.mxu0 0
    %1288 = vmatpush1.bf16.msra.mxu0 0
    %1289 = vmatprep.subr.bf16.mxu0 0
    %1290 = vmatpush1.bf16.msra.mxu0 0
    %1291 = vmatprep.subr.bf16.mxu0 0
    %1292 = vmatpush1.bf16.msra.mxu0 0
    %1293 = vmatprep.subr.bf16.mxu0 0
    %1294 = vmatpush1.bf16.msra.mxu0 %v1275
    %1295 = vmatprep.subr.bf16.mxu0 0
    %1296 = vmatpush1.bf16.msra.mxu0 %v1274
    %1297 = vmatprep.subr.bf16.mxu0 0
    %1298 = vmatpush2.bf16.msra.mxu0 0
    %1299 = vmatprep.subr.bf16.mxu0 0
    %1300 = vmatpush2.bf16.msra.mxu0 0
    %1301 = vmatprep.subr.bf16.mxu0 0
    %1302 = vmatpush2.bf16.msra.mxu0 0
    %1303 = vmatprep.subr.bf16.mxu0 0
    %1304 = vmatpush2.bf16.msra.mxu0 0
    %1305 = vmatprep.subr.bf16.mxu0 0
    %1306 = vmatpush2.bf16.msra.mxu0 0
    %1307 = vmatprep.subr.bf16.mxu0 0
    %1308 = vmatpush2.bf16.msra.mxu0 0
    %1309 = vmatprep.subr.bf16.mxu0 0
    %1310 = vmatpush2.bf16.msra.mxu0 0
    %1311 = vmatprep.subr.bf16.mxu0 0
    %1312 = vmatpush2.bf16.msra.mxu0 0
    %1313 = vmatprep.mubr.bf16.mxu0 0
    %1314 = vmatmul.mubr.bf16.gmra.mxu0 %v1279
    %v1315 = vpop.f32.mrf.mxu0
    %v1316 = vadd.f32 %v1264, %v1315
    %v1317 = vpop.f32.mrf.mxu0
    %v1318 = vpop.f32.mrf.mxu0
    %v1319 = vpop.f32.mrf.mxu0
    %1320 = vdwg.mxu0
    %v1321 = vadd.f32 %v135, %v1316
    %v1322 = vld [vmem:[#allocation11] sm:$0x1]
    %v1323 = vld [vmem:[#allocation13] sm:$0x1]
    %v1324 = vsel %vm160, %v1321, 0.0
    %1325 = vadd.xlane.f32.xlu0 %v1324
    %v1326 = vpop.xlane.xlu0 %1325
    %v1327 = vrcp.pop 32.0
    %v1328 = vmul.f32 %v1326, %v1327
    %v1329 = vsub.f32 %v1321, %v1328
    %v1330 = vmul.f32 %v1329, %v1329
    %v1331 = vsel %vm160, %v1330, 0.0
    %1332 = vadd.xlane.f32.xlu0 %v1331
    %v1333 = vpop.xlane.xlu0 %1332
    %v1334 = vmul.f32 %v1333, %v1327
    %v1335 = vadd.f32 %v1334, 1e-05
    %v1336 = vrsqrt.pop %v1335
    %v1337 = vmul.f32 %v1329, %v1336
    %v1339 = vlaneseq
    %v1340 = vshrl.u32 %v1339, 7
    %v1341 = vsub.s32 0, %v1340
    %v1342 = vrot.slane %v1322, %v1341
    %v1344 = vmul.f32 %v1337, %v1342
    %v1346 = vlaneseq
    %v1347 = vshrl.u32 %v1346, 7
    %v1348 = vsub.s32 0, %v1347
    %v1349 = vrot.slane %v1323, %v1348
    %v1351 = vadd.f32 %v1344, %v1349
    %v1352 = vpack.c.bf16 %v1351, %v1351
    %v1353 = vld [vmem:[%s11] sm:$0xf]
    %v1354 = vld [vmem:[%s11 + $0x4] sm:$0xf]
    %v1355 = vld [vmem:[%s11 + $0x8] sm:$0xf]
    %v1356 = vld [vmem:[%s11 + $0xc] sm:$0xf]
    %v1357 = vld [vmem:[%s12] sm:$0x1]
    %v1359 = vlaneseq
    %v1360 = vshrl.u32 %v1359, 7
    %v1361 = vsub.s32 0, %v1360
    %v1362 = vrot.slane %v1357, %v1361
    %v1368 = vunpack.c.l.b16 %v1353
    %v1369 = vunpack.c.l.b16 %v1354
    %v1370 = vunpack.c.l.b16 %v1355
    %v1371 = vunpack.c.l.b16 %v1356
    %v1372 = vpack.c.b16 %v1369, %v1368
    %v1373 = vpack.c.b16 %v1371, %v1370
    %v1377 = vsel %vm160, %v1352, 0
    %1379 = vmatprep.subr.bf16.mxu0 0
    %1380 = vmatpush1.bf16.msra.mxu0 0
    %1381 = vmatprep.subr.bf16.mxu0 0
    %1382 = vmatpush1.bf16.msra.mxu0 0
    %1383 = vmatprep.subr.bf16.mxu0 0
    %1384 = vmatpush1.bf16.msra.mxu0 0
    %1385 = vmatprep.subr.bf16.mxu0 0
    %1386 = vmatpush1.bf16.msra.mxu0 0
    %1387 = vmatprep.subr.bf16.mxu0 0
    %1388 = vmatpush1.bf16.msra.mxu0 0
    %1389 = vmatprep.subr.bf16.mxu0 0
    %1390 = vmatpush1.bf16.msra.mxu0 0
    %1391 = vmatprep.subr.bf16.mxu0 0
    %1392 = vmatpush1.bf16.msra.mxu0 %v1373
    %1393 = vmatprep.subr.bf16.mxu0 0
    %1394 = vmatpush1.bf16.msra.mxu0 %v1372
    %1395 = vmatprep.subr.bf16.mxu0 0
    %1396 = vmatpush2.bf16.msra.mxu0 0
    %1397 = vmatprep.subr.bf16.mxu0 0
    %1398 = vmatpush2.bf16.msra.mxu0 0
    %1399 = vmatprep.subr.bf16.mxu0 0
    %1400 = vmatpush2.bf16.msra.mxu0 0
    %1401 = vmatprep.subr.bf16.mxu0 0
    %1402 = vmatpush2.bf16.msra.mxu0 0
    %1403 = vmatprep.subr.bf16.mxu0 0
    %1404 = vmatpush2.bf16.msra.mxu0 0
    %1405 = vmatprep.subr.bf16.mxu0 0
    %1406 = vmatpush2.bf16.msra.mxu0 0
    %1407 = vmatprep.subr.bf16.mxu0 0
    %1408 = vmatpush2.bf16.msra.mxu0 0
    %1409 = vmatprep.subr.bf16.mxu0 0
    %1410 = vmatpush2.bf16.msra.mxu0 0
    %1411 = vmatprep.mubr.bf16.mxu0 0
    %1412 = vmatmul.mubr.bf16.gmra.mxu0 %v1377
    %v1413 = vpop.f32.mrf.mxu0
    %v1414 = vadd.f32 %v1362, %v1413
    %v1415 = vpop.f32.mrf.mxu0
    %v1416 = vpop.f32.mrf.mxu0
    %v1417 = vpop.f32.mrf.mxu0
    %1418 = vdwg.mxu0
    %1419 = vst.msk [vmem:[#allocation14] sm:$0xff] %vm160, %v1414
    // Predicated region
    $region82: #{tpu_custom_call.1} parent=1 // pred_check
      _
    $region83: #{tpu_custom_call.1} parent=1 // pred_check_branch
      %1421 = sbr.rel (0) target = $region85
    $region84: #{tpu_custom_call.1} parent=1 // pred_region
      %s1423 = ssub.s32 128, 128
      %1424 = vsyncadd [#allocation4], %s1423
      %s1426 = sshll.u32 [#allocation14], 4
      %s1427 = int_to_ptr.vmem [resolvable:$true] %s1426
      %1429 = dma.vmem_to_hbm [thread:$0]  %s1427, 128, %s13, [#allocation4]
    $region85: #{tpu_custom_call.1} parent=1 // pred_fallthru
      _
    // Predicated region
    $region86: #{tpu_custom_call.1} parent=1 // pred_check
      _
    $region87: #{tpu_custom_call.1} parent=1 // pred_check_branch
      %1431 = sbr.rel (0) target = $region89
    $region88: #{tpu_custom_call.1} parent=1 // pred_region
      %1432 = dma.done [#allocation4], 128
    $region89: #{tpu_custom_call.1} parent=1 // pred_fallthru
      _
    %1433 = vsyncpa [#allocation3], 1
    %1434 = vsyncpa [#allocation6], 1
    %1435 = vsyncpa [#allocation9], 1
    %1436 = vsyncpa [#allocation12], 1
    %1437 = vsyncpa [#allocation4], 1

</llo_original>
